<compile_context>
chip_gen: v7x
topology: tpu7x:2x2x1
jax: 0.10.0
libtpu: 0.0.40
codegen_flags: <defaults>
</compile_context>

<pallas_src>
import jax
import jax.numpy as jnp
from jax import lax
from jax.experimental import pallas as pl
from jax.experimental.pallas import tpu as pltpu

TEXT_HIDDEN = 768
IMAGE_HIDDEN = 512
COMBINED = 256
NUM_HEADS = 4
HEAD_DIM = COMBINED // NUM_HEADS          # 64
NUM_CLASSES = 10
NUM_CLASSES_PADDED = 128                  # lane-dense output slab

# Keep the softmax max-subtraction (one cheap reduce in the batched form).
# Setting False removes it; safe for the demo's O(1) scores, a correctness
# trade-off for arbitrary trained weights.
STABLE_SOFTMAX = True


def _fused_kernel(text_ref, image_ref,
                  wtq_ref,        # folded, pre-scaled text_fc -> q      (768, 256) bf16
                  wikv_ref,       # folded image_fc -> [k|v]             (512, 512) bf16
                  woc_ref,        # folded out_proj -> classifier        (256, 128) bf16
                  bias_ref,       # [bq | bkv | bc] fused biases         (1, 896)   f32
                  out_ref):       # (B, 128) f32
    f32 = jnp.float32
    bf16 = jnp.bfloat16

    # Static, 128-lane-aligned slices of the single fused bias input.
    bq = bias_ref[:, 0:COMBINED]                                    # (1, 256)
    bkv = bias_ref[:, COMBINED:3 * COMBINED]                        # (1, 512)
    bc = bias_ref[:, 3 * COMBINED:3 * COMBINED + NUM_CLASSES_PADDED]  # (1, 128)

    text = text_ref[...]                   # (B, 768) bf16
    image = image_ref[...]                 # (B, 512) bf16
    B = text.shape[0]
    n = NUM_HEADS * B

    # Folded projections: one MXU pass each (bf16 x bf16 -> f32 accumulate).
    # wtq/bq already carry the 1/sqrt(head_dim) attention scale.
    q = jnp.dot(text, wtq_ref[...], preferred_element_type=f32) + bq      # (B, 256)
    kv = jnp.dot(image, wikv_ref[...], preferred_element_type=f32) + bkv  # (B, 512)
    k = kv[:, :COMBINED]                   # 128-aligned lane slices (free)
    v = kv[:, COMBINED:]

    # Stack heads along sublanes: row h*B + b  <-  (head h, batch b).
    def stack_heads(x):
        return jnp.concatenate(
            [x[:, h * HEAD_DIM:(h + 1) * HEAD_DIM] for h in range(NUM_HEADS)],
            axis=0)                        # (NUM_HEADS*B, 64)

    qs = stack_heads(q)
    ks = stack_heads(k)
    vs = stack_heads(v)

    # ONE scores matmul for all heads (contract head_dim directly, no k.T).
    s = lax.dot_general(qs, ks, (((1,), (1,)), ((), ())),
                        preferred_element_type=f32)                 # (4B, 4B)

    # Block-diagonal same-head mask (constant, built from 2-D iota).
    r = lax.broadcasted_iota(jnp.int32, (n, n), 0)
    c = lax.broadcasted_iota(jnp.int32, (n, n), 1)
    if (B & (B - 1)) == 0:                 # power-of-two batch: shift, no int div
        shift = B.bit_length() - 1
        same = jnp.right_shift(r, shift) == jnp.right_shift(c, shift)
    else:
        same = (r // B) == (c // B)
    s = jnp.where(same, s, f32(-1e9))

    # Single batched softmax over all heads (f32 throughout; EUP reciprocal).
    if STABLE_SOFTMAX:
        s = s - jnp.max(s, axis=-1, keepdims=True)
    e = jnp.exp(s)
    p = e * pl.reciprocal(jnp.sum(e, axis=-1, keepdims=True), approx=True)

    # ONE p@v matmul for all heads.
    hs = jnp.dot(p, vs, preferred_element_type=f32)                 # (4B, 64)

    # Un-stack heads back along lanes (sublane slices are tile-aligned -> free),
    # then ONE folded out_proj+classifier matmul into the lane-dense output.
    attn = jnp.concatenate(
        [hs[h * B:(h + 1) * B, :] for h in range(NUM_HEADS)], axis=1)  # (B, 256)

    out_ref[...] = jnp.dot(attn.astype(bf16), woc_ref[...],
                           preferred_element_type=f32) + bc


def fold_params(p):
    """One-time algebraic fold of the original (unfolded, f32) parameters."""
    f32 = jnp.float32
    bf16 = jnp.bfloat16
    scale = f32(1.0) / jnp.sqrt(f32(HEAD_DIM))     # attention scale folded into q

    wtq = (p["wt"] @ p["wq"]) * scale                       # (768, 256)
    bq = (p["bt"] @ p["wq"] + p["bq"]) * scale              # (1, 256)

    wik = p["wi"] @ p["wk"]
    bk = p["bi"] @ p["wk"] + p["bk"]
    wiv = p["wi"] @ p["wv"]
    bv = p["bi"] @ p["wv"] + p["bv"]
    wikv = jnp.concatenate([wik, wiv], axis=1)              # (512, 512)
    bkv = jnp.concatenate([bk, bv], axis=1)                 # (1, 512)

    woc = p["wo"] @ p["wc"]                                 # (256, 10)
    bc = p["bo"] @ p["wc"] + p["bc"]                        # (1, 10)
    woc_pad = jnp.zeros((COMBINED, NUM_CLASSES_PADDED), f32).at[:, :NUM_CLASSES].set(woc)
    bc_pad = jnp.zeros((1, NUM_CLASSES_PADDED), f32).at[:, :NUM_CLASSES].set(bc)

    # All small f32 biases fused into one input: [bq | bkv | bc] -> (1, 896).
    biases = jnp.concatenate([bq, bkv, bc_pad], axis=1).astype(f32)

    return {
        "wtq": wtq.astype(bf16),
        "wikv": wikv.astype(bf16),
        "woc": woc_pad.astype(bf16),
        "biases": biases,
    }


def multimodal_attention_forward(text_features, image_features, folded):
    B = text_features.shape[0]
    vmem = pl.BlockSpec(memory_space=pltpu.MemorySpace.VMEM)
    args = (
        text_features.astype(jnp.bfloat16),
        image_features.astype(jnp.bfloat16),
        folded["wtq"], folded["wikv"], folded["woc"], folded["biases"],
    )
    out_padded = pl.pallas_call(
        _fused_kernel,
        out_shape=jax.ShapeDtypeStruct((B, NUM_CLASSES_PADDED), jnp.float32),
        in_specs=[vmem] * len(args),
        out_specs=vmem,
    )(*args)
    return out_padded[:, :NUM_CLASSES]


def init_params(key):
    ks = jax.random.split(key, 16)
    s = 0.02

    def w(k, shape):
        return s * jax.random.normal(k, shape, dtype=jnp.float32)

    # Weights stored as (in_features, out_features); biases as (1, out_features).
    return {
        "wt": w(ks[0], (TEXT_HIDDEN, COMBINED)),  "bt": w(ks[1], (1, COMBINED)),
        "wi": w(ks[2], (IMAGE_HIDDEN, COMBINED)), "bi": w(ks[3], (1, COMBINED)),
        "wq": w(ks[4], (COMBINED, COMBINED)),     "bq": w(ks[5], (1, COMBINED)),
        "wk": w(ks[6], (COMBINED, COMBINED)),     "bk": w(ks[7], (1, COMBINED)),
        "wv": w(ks[8], (COMBINED, COMBINED)),     "bv": w(ks[9], (1, COMBINED)),
        "wo": w(ks[10], (COMBINED, COMBINED)),    "bo": w(ks[11], (1, COMBINED)),
        "wc": w(ks[12], (COMBINED, NUM_CLASSES)), "bc": w(ks[13], (1, NUM_CLASSES)),
    }


def reference_forward(text_features, image_features, p):
    """Pure-JAX f32 reference mirroring the original (unfolded) PyTorch forward."""
    t = text_features @ p["wt"] + p["bt"]
    im = image_features @ p["wi"] + p["bi"]
    q = t @ p["wq"] + p["bq"]
    k = im @ p["wk"] + p["bk"]
    v = im @ p["wv"] + p["bv"]
    B = q.shape[0]
    qh = q.reshape(B, NUM_HEADS, HEAD_DIM).transpose(1, 0, 2)
    kh = k.reshape(B, NUM_HEADS, HEAD_DIM).transpose(1, 0, 2)
    vh = v.reshape(B, NUM_HEADS, HEAD_DIM).transpose(1, 0, 2)
    s = jnp.einsum("hqd,hkd->hqk", qh, kh) / jnp.sqrt(jnp.float32(HEAD_DIM))
    pmat = jax.nn.softmax(s, axis=-1)
    ah = jnp.einsum("hqk,hkd->hqd", pmat, vh)
    attn = ah.transpose(1, 0, 2).reshape(B, COMBINED)
    o = attn @ p["wo"] + p["bo"]
    return o @ p["wc"] + p["bc"]


if __name__ == "__main__":
    key = jax.random.PRNGKey(0)
    kp, kt, ki = jax.random.split(key, 3)
    params = init_params(kp)
    folded = fold_params(params)

    B = 8   # keep B a multiple of 8 (f32 sublanes); 16 preferred for bf16 packing
    text_features = jax.random.normal(kt, (B, TEXT_HIDDEN), dtype=jnp.float32)
    image_features = jax.random.normal(ki, (B, IMAGE_HIDDEN), dtype=jnp.float32)

    out = multimodal_attention_forward(text_features, image_features, folded)
    out = jax.block_until_ready(out)

    ref = reference_forward(text_features, image_features, params)
    assert out.shape == (B, NUM_CLASSES)
    # Folding is exact algebraically; tolerance covers the bf16 weight/activation
    # casts and the EUP approximate reciprocal in the softmax.
    assert jnp.allclose(out, ref, atol=5e-3, rtol=5e-2), (
        "mismatch vs reference: max abs diff = "
        f"{float(jnp.max(jnp.abs(out - ref)))}")

    print("KERNEL_OK")
</pallas_src>

<mosaic_0001>
module attributes {stable_mosaic.version = 11 : i64} {
  func.func @_fused_kernel(%arg0: memref<8x768xbf16, #tpu.memory_space<vmem>>, %arg1: memref<8x512xbf16, #tpu.memory_space<vmem>>, %arg2: memref<768x256xbf16, #tpu.memory_space<vmem>>, %arg3: memref<512x512xbf16, #tpu.memory_space<vmem>>, %arg4: memref<256x128xbf16, #tpu.memory_space<vmem>>, %arg5: memref<1x896xf32, #tpu.memory_space<vmem>>, %arg6: memref<8x128xf32, #tpu.memory_space<vmem>>) attributes {dimension_semantics = [], scalar_prefetch = 0 : i64, scratch_operands = 0 : i64, tpu.core_type = #tpu.core_type<tc>} {
    %c0 = arith.constant 0 : index
    %c0_0 = arith.constant 0 : index
    %0 = vector.load %arg5[%c0, %c0_0] : memref<1x896xf32, #tpu.memory_space<vmem>>, vector<1x256xf32>
    %c0_1 = arith.constant 0 : index
    %c256 = arith.constant 256 : index
    %1 = vector.load %arg5[%c0_1, %c256] : memref<1x896xf32, #tpu.memory_space<vmem>>, vector<1x512xf32>
    %c0_2 = arith.constant 0 : index
    %c768 = arith.constant 768 : index
    %2 = vector.load %arg5[%c0_2, %c768] : memref<1x896xf32, #tpu.memory_space<vmem>>, vector<1x128xf32>
    %c0_3 = arith.constant 0 : index
    %c0_4 = arith.constant 0 : index
    %3 = vector.load %arg0[%c0_3, %c0_4] : memref<8x768xbf16, #tpu.memory_space<vmem>>, vector<8x768xbf16>
    %c0_5 = arith.constant 0 : index
    %c0_6 = arith.constant 0 : index
    %4 = vector.load %arg1[%c0_5, %c0_6] : memref<8x512xbf16, #tpu.memory_space<vmem>>, vector<8x512xbf16>
    %c0_7 = arith.constant 0 : index
    %c0_8 = arith.constant 0 : index
    %5 = vector.load %arg2[%c0_7, %c0_8] : memref<768x256xbf16, #tpu.memory_space<vmem>>, vector<768x256xbf16>
    %cst = arith.constant dense<0.000000e+00> : vector<8x256xf32>
    %6 = tpu.matmul %3, %5, %cst {dimension_numbers = #tpu.dot_dimension_numbers<[1], [0], [0], [1], [0, 0, 1, 1], [], []>} : vector<8x768xbf16>, vector<768x256xbf16>, vector<8x256xf32> -> vector<8x256xf32>
    %7 = vector.broadcast %0 : vector<1x256xf32> to vector<8x256xf32>
    %8 = arith.addf %6, %7 : vector<8x256xf32>
    %c0_9 = arith.constant 0 : index
    %c0_10 = arith.constant 0 : index
    %9 = vector.load %arg3[%c0_9, %c0_10] : memref<512x512xbf16, #tpu.memory_space<vmem>>, vector<512x512xbf16>
    %cst_11 = arith.constant dense<0.000000e+00> : vector<8x512xf32>
    %10 = tpu.matmul %4, %9, %cst_11 {dimension_numbers = #tpu.dot_dimension_numbers<[1], [0], [0], [1], [0, 0, 1, 1], [], []>} : vector<8x512xbf16>, vector<512x512xbf16>, vector<8x512xf32> -> vector<8x512xf32>
    %11 = vector.broadcast %1 : vector<1x512xf32> to vector<8x512xf32>
    %12 = arith.addf %10, %11 : vector<8x512xf32>
    %13 = vector.extract_strided_slice %12 {offsets = [0, 0], sizes = [8, 256], strides = [1, 1]} : vector<8x512xf32> to vector<8x256xf32>
    %14 = vector.extract_strided_slice %12 {offsets = [0, 256], sizes = [8, 256], strides = [1, 1]} : vector<8x512xf32> to vector<8x256xf32>
    %15 = vector.extract_strided_slice %8 {offsets = [0, 0], sizes = [8, 64], strides = [1, 1]} : vector<8x256xf32> to vector<8x64xf32>
    %16 = vector.extract_strided_slice %8 {offsets = [0, 64], sizes = [8, 64], strides = [1, 1]} : vector<8x256xf32> to vector<8x64xf32>
    %17 = vector.extract_strided_slice %8 {offsets = [0, 128], sizes = [8, 64], strides = [1, 1]} : vector<8x256xf32> to vector<8x64xf32>
    %18 = vector.extract_strided_slice %8 {offsets = [0, 192], sizes = [8, 64], strides = [1, 1]} : vector<8x256xf32> to vector<8x64xf32>
    %19 = tpu.concatenate %15, %16, %17, %18 in 0 : vector<8x64xf32>, vector<8x64xf32>, vector<8x64xf32>, vector<8x64xf32> -> vector<32x64xf32>
    %20 = vector.extract_strided_slice %13 {offsets = [0, 0], sizes = [8, 64], strides = [1, 1]} : vector<8x256xf32> to vector<8x64xf32>
    %21 = vector.extract_strided_slice %13 {offsets = [0, 64], sizes = [8, 64], strides = [1, 1]} : vector<8x256xf32> to vector<8x64xf32>
    %22 = vector.extract_strided_slice %13 {offsets = [0, 128], sizes = [8, 64], strides = [1, 1]} : vector<8x256xf32> to vector<8x64xf32>
    %23 = vector.extract_strided_slice %13 {offsets = [0, 192], sizes = [8, 64], strides = [1, 1]} : vector<8x256xf32> to vector<8x64xf32>
    %24 = tpu.concatenate %20, %21, %22, %23 in 0 : vector<8x64xf32>, vector<8x64xf32>, vector<8x64xf32>, vector<8x64xf32> -> vector<32x64xf32>
    %25 = vector.extract_strided_slice %14 {offsets = [0, 0], sizes = [8, 64], strides = [1, 1]} : vector<8x256xf32> to vector<8x64xf32>
    %26 = vector.extract_strided_slice %14 {offsets = [0, 64], sizes = [8, 64], strides = [1, 1]} : vector<8x256xf32> to vector<8x64xf32>
    %27 = vector.extract_strided_slice %14 {offsets = [0, 128], sizes = [8, 64], strides = [1, 1]} : vector<8x256xf32> to vector<8x64xf32>
    %28 = vector.extract_strided_slice %14 {offsets = [0, 192], sizes = [8, 64], strides = [1, 1]} : vector<8x256xf32> to vector<8x64xf32>
    %29 = tpu.concatenate %25, %26, %27, %28 in 0 : vector<8x64xf32>, vector<8x64xf32>, vector<8x64xf32>, vector<8x64xf32> -> vector<32x64xf32>
    %cst_12 = arith.constant dense<0.000000e+00> : vector<32x32xf32>
    %30 = tpu.matmul %19, %24, %cst_12 {dimension_numbers = #tpu.dot_dimension_numbers<[1], [1], [0], [0], [0, 0, 1, 0], [], []>} : vector<32x64xf32>, vector<32x64xf32>, vector<32x32xf32> -> vector<32x32xf32>
    %31 = tpu.iota {dimensions = array<i32: 0>} : vector<32x32xi32>
    %32 = tpu.iota {dimensions = array<i32: 1>} : vector<32x32xi32>
    %c3_i32 = arith.constant 3 : i32
    %33 = vector.broadcast %c3_i32 : i32 to vector<32x32xi32>
    %34 = arith.shrsi %31, %33 : vector<32x32xi32>
    %c3_i32_13 = arith.constant 3 : i32
    %35 = vector.broadcast %c3_i32_13 : i32 to vector<32x32xi32>
    %36 = arith.shrsi %32, %35 : vector<32x32xi32>
    %37 = arith.cmpi eq, %34, %36 : vector<32x32xi32>
    %cst_14 = arith.constant -1.000000e+09 : f32
    %38 = vector.broadcast %cst_14 : f32 to vector<32x32xf32>
    %39 = arith.select %37, %30, %38 : vector<32x32xi1>, vector<32x32xf32>
    %cst_15 = arith.constant dense<0xFF800000> : vector<32xf32>
    %40 = vector.multi_reduction <maximumf>, %39, %cst_15 [1] : vector<32x32xf32> to vector<32xf32>
    %41 = vector.shape_cast %40 : vector<32xf32> to vector<32x1xf32>
    %42 = vector.broadcast %41 : vector<32x1xf32> to vector<32x32xf32>
    %43 = arith.subf %39, %42 : vector<32x32xf32>
    %44 = math.exp %43 : vector<32x32xf32>
    %cst_16 = arith.constant dense<0.000000e+00> : vector<32xf32>
    %45 = vector.multi_reduction <add>, %44, %cst_16 [1] : vector<32x32xf32> to vector<32xf32>
    %46 = vector.shape_cast %45 : vector<32xf32> to vector<32x1xf32>
    %47 = tpu.reciprocal %46 {approx = true} : vector<32x1xf32> -> vector<32x1xf32>
    %48 = vector.broadcast %47 : vector<32x1xf32> to vector<32x32xf32>
    %49 = arith.mulf %44, %48 : vector<32x32xf32>
    %cst_17 = arith.constant dense<0.000000e+00> : vector<32x64xf32>
    %50 = tpu.matmul %49, %29, %cst_17 {dimension_numbers = #tpu.dot_dimension_numbers<[1], [0], [0], [1], [0, 0, 1, 1], [], []>} : vector<32x32xf32>, vector<32x64xf32>, vector<32x64xf32> -> vector<32x64xf32>
    %51 = vector.extract_strided_slice %50 {offsets = [0, 0], sizes = [8, 64], strides = [1, 1]} : vector<32x64xf32> to vector<8x64xf32>
    %52 = vector.extract_strided_slice %50 {offsets = [8, 0], sizes = [8, 64], strides = [1, 1]} : vector<32x64xf32> to vector<8x64xf32>
    %53 = vector.extract_strided_slice %50 {offsets = [16, 0], sizes = [8, 64], strides = [1, 1]} : vector<32x64xf32> to vector<8x64xf32>
    %54 = vector.extract_strided_slice %50 {offsets = [24, 0], sizes = [8, 64], strides = [1, 1]} : vector<32x64xf32> to vector<8x64xf32>
    %55 = tpu.concatenate %51, %52, %53, %54 in 1 : vector<8x64xf32>, vector<8x64xf32>, vector<8x64xf32>, vector<8x64xf32> -> vector<8x256xf32>
    %56 = arith.truncf %55 : vector<8x256xf32> to vector<8x256xbf16>
    %c0_18 = arith.constant 0 : index
    %c0_19 = arith.constant 0 : index
    %57 = vector.load %arg4[%c0_18, %c0_19] : memref<256x128xbf16, #tpu.memory_space<vmem>>, vector<256x128xbf16>
    %cst_20 = arith.constant dense<0.000000e+00> : vector<8x128xf32>
    %58 = tpu.matmul %56, %57, %cst_20 {dimension_numbers = #tpu.dot_dimension_numbers<[1], [0], [0], [1], [0, 0, 1, 1], [], []>} : vector<8x256xbf16>, vector<256x128xbf16>, vector<8x128xf32> -> vector<8x128xf32>
    %59 = vector.broadcast %2 : vector<1x128xf32> to vector<8x128xf32>
    %60 = arith.addf %58, %59 : vector<8x128xf32>
    %c0_21 = arith.constant 0 : index
    %c0_22 = arith.constant 0 : index
    %61 = vector.load %arg6[%c0_21, %c0_22] : memref<8x128xf32, #tpu.memory_space<vmem>>, vector<8x128xf32>
    tpu.vector_store %arg6[%c0_21, %c0_22], %60 {strides = array<i32>} : memref<8x128xf32, #tpu.memory_space<vmem>>, vector<8x128xf32>,
    return
  }
}

</mosaic_0001>

<llo_original>
// kernel: tpu_custom_call.1
$region0: #{tpu_custom_call.1}
  #allocation0 [shape = 'u32[]', space=smem, size = 0x4, offset = 0x4, fixed_abs, tag = 'smem constant byte address 0x4 - core index']
  #allocation1 [shape = 'u32[144,128]{1,0:T(1,128)}', space=vmem, size = 0x12000, scoped, tag = 'internal scratch']
  %s0 = inlined_call_operand.hbm [shape: bf16[8,768], index: 0, kind: input, shape index: {}]
  %s1 = inlined_call_operand.hbm [shape: bf16[8,512], index: 1, kind: input, shape index: {}]
  %s2 = inlined_call_operand.hbm [shape: bf16[768,256], index: 2, kind: input, shape index: {}]
  %s3 = inlined_call_operand.hbm [shape: bf16[512,512], index: 3, kind: input, shape index: {}]
  %s4 = inlined_call_operand.hbm [shape: bf16[256,128], index: 4, kind: input, shape index: {}]
  %s5 = inlined_call_operand.vmem [shape: f32[1,896], index: 5, kind: input, shape index: {}]
  %s6 = inlined_call_operand.hbm [shape: f32[8,128], index: 6, kind: output, shape index: {}]
  %s7 = sld [smem:[#allocation0]]
  $region54: #{tpu_custom_call.1} parent=0
    _
  %s9 = ssub.s32 1, %s7
  %s10 = scalar_select 0, %s9, %s7
  $region1: #{tpu_custom_call.1} parent=0
    #allocation2 [shape = 'u8[12288]{0}', space=vmem, size = 0x3000, scoped, tag = 'input window, operand 0, single buffered']
    #allocation3 [shape = 's32[1]{0}', space=sflag, size = 0x4, scoped, tag = 'scoped memory for tpu_custom_call.1']
    #allocation4 [shape = 's32[1]{0}', space=sflag, size = 0x4, scoped, tag = 'scoped memory for tpu_custom_call.1']
    #allocation5 [shape = 'u8[8192]{0}', space=vmem, size = 0x2000, scoped, tag = 'input window, operand 1, single buffered']
    #allocation6 [shape = 's32[1]{0}', space=sflag, size = 0x4, scoped, tag = 'scoped memory for tpu_custom_call.1']
    #allocation7 [shape = 'u8[393216]{0}', space=vmem, size = 0x60000, scoped, tag = 'input window, operand 2, single buffered']
    #allocation8 [shape = 'u8[524288]{0}', space=vmem, size = 0x80000, scoped, tag = 'input window, operand 3, single buffered']
    #allocation9 [shape = 's32[1]{0}', space=sflag, size = 0x4, scoped, tag = 'scoped memory for tpu_custom_call.1']
    #allocation10 [shape = 'u8[65536]{0}', space=vmem, size = 0x10000, scoped, tag = 'input window, operand 4, single buffered']
    #allocation11 [shape = 'u8[4096]{0}', space=vmem, size = 0x1000, scoped, tag = 'output window, operand 0, single buffered']
    %11 = vsyncpa [#allocation3], 0
    %12 = vsyncpa [#allocation6], 0
    %13 = vsyncpa [#allocation9], 0
    %14 = vsyncpa [#allocation4], 0
    // Predicated region
    $region2: #{tpu_custom_call.1} parent=1 // pred_check
      _
    $region3: #{tpu_custom_call.1} parent=1 // pred_check_branch
      %16 = sbr.rel (0) target = $region5
    $region4: #{tpu_custom_call.1} parent=1 // pred_region
      %s18 = ssub.s32 384, 384
      %19 = vsyncadd [#allocation3], %s18
      %s21 = sshll.u32 [#allocation2], 4
      %s22 = int_to_ptr.vmem [resolvable:$true] %s21
      %24 = dma.hbm_to_vmem [thread:$0]  %s0, 384, %s22, [#allocation3]
    $region5: #{tpu_custom_call.1} parent=1 // pred_fallthru
      _
    // Predicated region
    $region6: #{tpu_custom_call.1} parent=1 // pred_check
      _
    $region7: #{tpu_custom_call.1} parent=1 // pred_check_branch
      %26 = sbr.rel (0) target = $region9
    $region8: #{tpu_custom_call.1} parent=1 // pred_region
      %s28 = ssub.s32 256, 256
      %29 = vsyncadd [#allocation6], %s28
      %s31 = sshll.u32 [#allocation5], 4
      %s32 = int_to_ptr.vmem [resolvable:$true] %s31
      %34 = dma.hbm_to_vmem [thread:$0]  %s1, 256, %s32, [#allocation6]
    $region9: #{tpu_custom_call.1} parent=1 // pred_fallthru
      _
    // Predicated region
    $region10: #{tpu_custom_call.1} parent=1 // pred_check
      _
    $region11: #{tpu_custom_call.1} parent=1 // pred_check_branch
      %36 = sbr.rel (0) target = $region13
    $region12: #{tpu_custom_call.1} parent=1 // pred_region
      %s38 = ssub.s32 12288, 12288
      %39 = vsyncadd [#allocation6], %s38
      %s40 = sshll.u32 [#allocation7], 4
      %s41 = int_to_ptr.vmem [resolvable:$true] %s40
      %46 = dma.hbm_to_vmem [thread:$0]  %s2, 12288, %s41, [#allocation6], 128, 128, 8
    $region13: #{tpu_custom_call.1} parent=1 // pred_fallthru
      _
    // Predicated region
    $region14: #{tpu_custom_call.1} parent=1 // pred_check
      _
    $region15: #{tpu_custom_call.1} parent=1 // pred_check_branch
      %48 = sbr.rel (0) target = $region17
    $region16: #{tpu_custom_call.1} parent=1 // pred_region
      %s50 = ssub.s32 16384, 16384
      %51 = vsyncadd [#allocation9], %s50
      %s52 = sshll.u32 [#allocation8], 4
      %s53 = int_to_ptr.vmem [resolvable:$true] %s52
      %58 = dma.hbm_to_vmem [thread:$0]  %s3, 16384, %s53, [#allocation9], 256, 256, 16
    $region17: #{tpu_custom_call.1} parent=1 // pred_fallthru
      _
    // Predicated region
    $region18: #{tpu_custom_call.1} parent=1 // pred_check
      _
    $region19: #{tpu_custom_call.1} parent=1 // pred_check_branch
      %60 = sbr.rel (0) target = $region21
    $region20: #{tpu_custom_call.1} parent=1 // pred_region
      %s62 = ssub.s32 2048, 2048
      %63 = vsyncadd [#allocation9], %s62
      %s64 = sshll.u32 [#allocation10], 4
      %s65 = int_to_ptr.vmem [resolvable:$true] %s64
      %70 = dma.hbm_to_vmem [thread:$0]  %s4, 2048, %s65, [#allocation9], 64, 64, 4
    $region21: #{tpu_custom_call.1} parent=1 // pred_fallthru
      _
    // Predicated region
    $region22: #{tpu_custom_call.1} parent=1 // pred_check
      _
    $region23: #{tpu_custom_call.1} parent=1 // pred_check_branch
      %72 = sbr.rel (0) target = $region25
    $region24: #{tpu_custom_call.1} parent=1 // pred_region
      _
    $region25: #{tpu_custom_call.1} parent=1 // pred_fallthru
      _
    // Predicated region
    $region26: #{tpu_custom_call.1} parent=1 // pred_check
      _
    $region27: #{tpu_custom_call.1} parent=1 // pred_check_branch
      %74 = sbr.rel (0) target = $region29
    $region28: #{tpu_custom_call.1} parent=1 // pred_region
      %75 = dma.done [#allocation3], 384
    $region29: #{tpu_custom_call.1} parent=1 // pred_fallthru
      _
    // Predicated region
    $region30: #{tpu_custom_call.1} parent=1 // pred_check
      _
    $region31: #{tpu_custom_call.1} parent=1 // pred_check_branch
      %77 = sbr.rel (0) target = $region33
    $region32: #{tpu_custom_call.1} parent=1 // pred_region
      %78 = dma.done [#allocation6], 256
    $region33: #{tpu_custom_call.1} parent=1 // pred_fallthru
      _
    // Predicated region
    $region34: #{tpu_custom_call.1} parent=1 // pred_check
      _
    $region35: #{tpu_custom_call.1} parent=1 // pred_check_branch
      %80 = sbr.rel (0) target = $region37
    $region36: #{tpu_custom_call.1} parent=1 // pred_region
      %81 = dma.done [#allocation6], 12288
    $region37: #{tpu_custom_call.1} parent=1 // pred_fallthru
      _
    // Predicated region
    $region38: #{tpu_custom_call.1} parent=1 // pred_check
      _
    $region39: #{tpu_custom_call.1} parent=1 // pred_check_branch
      %83 = sbr.rel (0) target = $region41
    $region40: #{tpu_custom_call.1} parent=1 // pred_region
      %84 = dma.done [#allocation9], 16384
    $region41: #{tpu_custom_call.1} parent=1 // pred_fallthru
      _
    // Predicated region
    $region42: #{tpu_custom_call.1} parent=1 // pred_check
      _
    $region43: #{tpu_custom_call.1} parent=1 // pred_check_branch
      %86 = sbr.rel (0) target = $region45
    $region44: #{tpu_custom_call.1} parent=1 // pred_region
      %87 = dma.done [#allocation9], 2048
    $region45: #{tpu_custom_call.1} parent=1 // pred_fallthru
      _
    %v89 = vld [vmem:[%s5] sm:$0x3]
    %v90 = vld [vmem:[%s5 + $0x2] sm:$0xf]
    %v91 = vld [vmem:[%s5 + $0x6] sm:$0x1]
    %v92 = vld [vmem:[#allocation2] sm:$0xff]
    %v93 = vld [vmem:[#allocation2 + $0x8] sm:$0xff]
    %v94 = vld [vmem:[#allocation2 + $0x10] sm:$0xff]
    %v95 = vld [vmem:[#allocation5] sm:$0xff]
    %v96 = vld [vmem:[#allocation5 + $0x8] sm:$0xff]
    %v97 = vld [vmem:[#allocation7] sm:$0xff]
    %v98 = vld [vmem:[#allocation7 + $0x8] sm:$0xff]
    %v99 = vld [vmem:[#allocation7 + $0x10] sm:$0xff]
    %v100 = vld [vmem:[#allocation7 + $0x18] sm:$0xff]
    %v101 = vld [vmem:[#allocation7 + $0x20] sm:$0xff]
    %v102 = vld [vmem:[#allocation7 + $0x28] sm:$0xff]
    %v103 = vld [vmem:[#allocation7 + $0x30] sm:$0xff]
    %v104 = vld [vmem:[#allocation7 + $0x38] sm:$0xff]
    %v105 = vld [vmem:[#allocation7 + $0x40] sm:$0xff]
    %v106 = vld [vmem:[#allocation7 + $0x48] sm:$0xff]
    %v107 = vld [vmem:[#allocation7 + $0x50] sm:$0xff]
    %v108 = vld [vmem:[#allocation7 + $0x58] sm:$0xff]
    %v109 = vld [vmem:[#allocation7 + $0x60] sm:$0xff]
    %v110 = vld [vmem:[#allocation7 + $0x68] sm:$0xff]
    %v111 = vld [vmem:[#allocation7 + $0x70] sm:$0xff]
    %v112 = vld [vmem:[#allocation7 + $0x78] sm:$0xff]
    %v113 = vld [vmem:[#allocation7 + $0x80] sm:$0xff]
    %v114 = vld [vmem:[#allocation7 + $0x88] sm:$0xff]
    %v115 = vld [vmem:[#allocation7 + $0x90] sm:$0xff]
    %v116 = vld [vmem:[#allocation7 + $0x98] sm:$0xff]
    %v117 = vld [vmem:[#allocation7 + $0xa0] sm:$0xff]
    %v118 = vld [vmem:[#allocation7 + $0xa8] sm:$0xff]
    %v119 = vld [vmem:[#allocation7 + $0xb0] sm:$0xff]
    %v120 = vld [vmem:[#allocation7 + $0xb8] sm:$0xff]
    %v121 = vld [vmem:[#allocation7 + $0xc0] sm:$0xff]
    %v122 = vld [vmem:[#allocation7 + $0xc8] sm:$0xff]
    %v123 = vld [vmem:[#allocation7 + $0xd0] sm:$0xff]
    %v124 = vld [vmem:[#allocation7 + $0xd8] sm:$0xff]
    %v125 = vld [vmem:[#allocation7 + $0xe0] sm:$0xff]
    %v126 = vld [vmem:[#allocation7 + $0xe8] sm:$0xff]
    %v127 = vld [vmem:[#allocation7 + $0xf0] sm:$0xff]
    %v128 = vld [vmem:[#allocation7 + $0xf8] sm:$0xff]
    %v129 = vld [vmem:[#allocation7 + $0x100] sm:$0xff]
    %v130 = vld [vmem:[#allocation7 + $0x108] sm:$0xff]
    %v131 = vld [vmem:[#allocation7 + $0x110] sm:$0xff]
    %v132 = vld [vmem:[#allocation7 + $0x118] sm:$0xff]
    %v133 = vld [vmem:[#allocation7 + $0x120] sm:$0xff]
    %v134 = vld [vmem:[#allocation7 + $0x128] sm:$0xff]
    %v135 = vld [vmem:[#allocation7 + $0x130] sm:$0xff]
    %v136 = vld [vmem:[#allocation7 + $0x138] sm:$0xff]
    %v137 = vld [vmem:[#allocation7 + $0x140] sm:$0xff]
    %v138 = vld [vmem:[#allocation7 + $0x148] sm:$0xff]
    %v139 = vld [vmem:[#allocation7 + $0x150] sm:$0xff]
    %v140 = vld [vmem:[#allocation7 + $0x158] sm:$0xff]
    %v141 = vld [vmem:[#allocation7 + $0x160] sm:$0xff]
    %v142 = vld [vmem:[#allocation7 + $0x168] sm:$0xff]
    %v143 = vld [vmem:[#allocation7 + $0x170] sm:$0xff]
    %v144 = vld [vmem:[#allocation7 + $0x178] sm:$0xff]
    %v145 = vld [vmem:[#allocation7 + $0x180] sm:$0xff]
    %v146 = vld [vmem:[#allocation7 + $0x188] sm:$0xff]
    %v147 = vld [vmem:[#allocation7 + $0x190] sm:$0xff]
    %v148 = vld [vmem:[#allocation7 + $0x198] sm:$0xff]
    %v149 = vld [vmem:[#allocation7 + $0x1a0] sm:$0xff]
    %v150 = vld [vmem:[#allocation7 + $0x1a8] sm:$0xff]
    %v151 = vld [vmem:[#allocation7 + $0x1b0] sm:$0xff]
    %v152 = vld [vmem:[#allocation7 + $0x1b8] sm:$0xff]
    %v153 = vld [vmem:[#allocation7 + $0x1c0] sm:$0xff]
    %v154 = vld [vmem:[#allocation7 + $0x1c8] sm:$0xff]
    %v155 = vld [vmem:[#allocation7 + $0x1d0] sm:$0xff]
    %v156 = vld [vmem:[#allocation7 + $0x1d8] sm:$0xff]
    %v157 = vld [vmem:[#allocation7 + $0x1e0] sm:$0xff]
    %v158 = vld [vmem:[#allocation7 + $0x1e8] sm:$0xff]
    %v159 = vld [vmem:[#allocation7 + $0x1f0] sm:$0xff]
    %v160 = vld [vmem:[#allocation7 + $0x1f8] sm:$0xff]
    %v161 = vld [vmem:[#allocation7 + $0x200] sm:$0xff]
    %v162 = vld [vmem:[#allocation7 + $0x208] sm:$0xff]
    %v163 = vld [vmem:[#allocation7 + $0x210] sm:$0xff]
    %v164 = vld [vmem:[#allocation7 + $0x218] sm:$0xff]
    %v165 = vld [vmem:[#allocation7 + $0x220] sm:$0xff]
    %v166 = vld [vmem:[#allocation7 + $0x228] sm:$0xff]
    %v167 = vld [vmem:[#allocation7 + $0x230] sm:$0xff]
    %v168 = vld [vmem:[#allocation7 + $0x238] sm:$0xff]
    %v169 = vld [vmem:[#allocation7 + $0x240] sm:$0xff]
    %v170 = vld [vmem:[#allocation7 + $0x248] sm:$0xff]
    %v171 = vld [vmem:[#allocation7 + $0x250] sm:$0xff]
    %v172 = vld [vmem:[#allocation7 + $0x258] sm:$0xff]
    %v173 = vld [vmem:[#allocation7 + $0x260] sm:$0xff]
    %v174 = vld [vmem:[#allocation7 + $0x268] sm:$0xff]
    %v175 = vld [vmem:[#allocation7 + $0x270] sm:$0xff]
    %v176 = vld [vmem:[#allocation7 + $0x278] sm:$0xff]
    %v177 = vld [vmem:[#allocation7 + $0x280] sm:$0xff]
    %v178 = vld [vmem:[#allocation7 + $0x288] sm:$0xff]
    %v179 = vld [vmem:[#allocation7 + $0x290] sm:$0xff]
    %v180 = vld [vmem:[#allocation7 + $0x298] sm:$0xff]
    %v181 = vld [vmem:[#allocation7 + $0x2a0] sm:$0xff]
    %v182 = vld [vmem:[#allocation7 + $0x2a8] sm:$0xff]
    %v183 = vld [vmem:[#allocation7 + $0x2b0] sm:$0xff]
    %v184 = vld [vmem:[#allocation7 + $0x2b8] sm:$0xff]
    %v185 = vld [vmem:[#allocation7 + $0x2c0] sm:$0xff]
    %v186 = vld [vmem:[#allocation7 + $0x2c8] sm:$0xff]
    %v187 = vld [vmem:[#allocation7 + $0x2d0] sm:$0xff]
    %v188 = vld [vmem:[#allocation7 + $0x2d8] sm:$0xff]
    %v189 = vld [vmem:[#allocation7 + $0x2e0] sm:$0xff]
    %v190 = vld [vmem:[#allocation7 + $0x2e8] sm:$0xff]
    %v191 = vld [vmem:[#allocation7 + $0x2f0] sm:$0xff]
    %v192 = vld [vmem:[#allocation7 + $0x2f8] sm:$0xff]
    %v194 = vlaneseq
    %v195 = vshrl.u32 %v194, 7
    %v196 = vsub.s32 0, %v195
    %v197 = vrot.slane %v89, %v196
    %v198 = vlaneseq
    %v199 = vshrl.u32 %v198, 7
    %v200 = vsub.s32 1, %v199
    %v201 = vrot.slane %v89, %v200
    %v207 = vunpack.c.l.b16 %v92
    %v208 = vunpack.c.h.b16 %v92
    %v209 = vunpack.c.l.b16 %v93
    %v210 = vunpack.c.h.b16 %v93
    %v211 = vunpack.c.l.b16 %v94
    %v212 = vunpack.c.h.b16 %v94
    %v213 = vpack.c.b16 %v207, %v207
    %v214 = vpack.c.b16 %v208, %v208
    %v215 = vpack.c.b16 %v209, %v209
    %v216 = vpack.c.b16 %v210, %v210
    %v217 = vpack.c.b16 %v211, %v211
    %v218 = vpack.c.b16 %v212, %v212
    %v321 = vunpack.c.l.b16 %v97
    %v322 = vunpack.c.h.b16 %v97
    %v323 = vunpack.c.l.b16 %v98
    %v324 = vunpack.c.h.b16 %v98
    %v325 = vunpack.c.l.b16 %v99
    %v326 = vunpack.c.h.b16 %v99
    %v327 = vunpack.c.l.b16 %v100
    %v328 = vunpack.c.h.b16 %v100
    %v329 = vunpack.c.l.b16 %v101
    %v330 = vunpack.c.h.b16 %v101
    %v331 = vunpack.c.l.b16 %v102
    %v332 = vunpack.c.h.b16 %v102
    %v333 = vunpack.c.l.b16 %v103
    %v334 = vunpack.c.h.b16 %v103
    %v335 = vunpack.c.l.b16 %v104
    %v336 = vunpack.c.h.b16 %v104
    %v337 = vunpack.c.l.b16 %v105
    %v338 = vunpack.c.h.b16 %v105
    %v339 = vunpack.c.l.b16 %v106
    %v340 = vunpack.c.h.b16 %v106
    %v341 = vunpack.c.l.b16 %v107
    %v342 = vunpack.c.h.b16 %v107
    %v343 = vunpack.c.l.b16 %v108
    %v344 = vunpack.c.h.b16 %v108
    %v345 = vunpack.c.l.b16 %v109
    %v346 = vunpack.c.h.b16 %v109
    %v347 = vunpack.c.l.b16 %v110
    %v348 = vunpack.c.h.b16 %v110
    %v349 = vunpack.c.l.b16 %v111
    %v350 = vunpack.c.h.b16 %v111
    %v351 = vunpack.c.l.b16 %v112
    %v352 = vunpack.c.h.b16 %v112
    %v353 = vunpack.c.l.b16 %v113
    %v354 = vunpack.c.h.b16 %v113
    %v355 = vunpack.c.l.b16 %v114
    %v356 = vunpack.c.h.b16 %v114
    %v357 = vunpack.c.l.b16 %v115
    %v358 = vunpack.c.h.b16 %v115
    %v359 = vunpack.c.l.b16 %v116
    %v360 = vunpack.c.h.b16 %v116
    %v361 = vunpack.c.l.b16 %v117
    %v362 = vunpack.c.h.b16 %v117
    %v363 = vunpack.c.l.b16 %v118
    %v364 = vunpack.c.h.b16 %v118
    %v365 = vunpack.c.l.b16 %v119
    %v366 = vunpack.c.h.b16 %v119
    %v367 = vunpack.c.l.b16 %v120
    %v368 = vunpack.c.h.b16 %v120
    %v369 = vunpack.c.l.b16 %v121
    %v370 = vunpack.c.h.b16 %v121
    %v371 = vunpack.c.l.b16 %v122
    %v372 = vunpack.c.h.b16 %v122
    %v373 = vunpack.c.l.b16 %v123
    %v374 = vunpack.c.h.b16 %v123
    %v375 = vunpack.c.l.b16 %v124
    %v376 = vunpack.c.h.b16 %v124
    %v377 = vunpack.c.l.b16 %v125
    %v378 = vunpack.c.h.b16 %v125
    %v379 = vunpack.c.l.b16 %v126
    %v380 = vunpack.c.h.b16 %v126
    %v381 = vunpack.c.l.b16 %v127
    %v382 = vunpack.c.h.b16 %v127
    %v383 = vunpack.c.l.b16 %v128
    %v384 = vunpack.c.h.b16 %v128
    %v385 = vunpack.c.l.b16 %v129
    %v386 = vunpack.c.h.b16 %v129
    %v387 = vunpack.c.l.b16 %v130
    %v388 = vunpack.c.h.b16 %v130
    %v389 = vunpack.c.l.b16 %v131
    %v390 = vunpack.c.h.b16 %v131
    %v391 = vunpack.c.l.b16 %v132
    %v392 = vunpack.c.h.b16 %v132
    %v393 = vunpack.c.l.b16 %v133
    %v394 = vunpack.c.h.b16 %v133
    %v395 = vunpack.c.l.b16 %v134
    %v396 = vunpack.c.h.b16 %v134
    %v397 = vunpack.c.l.b16 %v135
    %v398 = vunpack.c.h.b16 %v135
    %v399 = vunpack.c.l.b16 %v136
    %v400 = vunpack.c.h.b16 %v136
    %v401 = vunpack.c.l.b16 %v137
    %v402 = vunpack.c.h.b16 %v137
    %v403 = vunpack.c.l.b16 %v138
    %v404 = vunpack.c.h.b16 %v138
    %v405 = vunpack.c.l.b16 %v139
    %v406 = vunpack.c.h.b16 %v139
    %v407 = vunpack.c.l.b16 %v140
    %v408 = vunpack.c.h.b16 %v140
    %v409 = vunpack.c.l.b16 %v141
    %v410 = vunpack.c.h.b16 %v141
    %v411 = vunpack.c.l.b16 %v142
    %v412 = vunpack.c.h.b16 %v142
    %v413 = vunpack.c.l.b16 %v143
    %v414 = vunpack.c.h.b16 %v143
    %v415 = vunpack.c.l.b16 %v144
    %v416 = vunpack.c.h.b16 %v144
    %v417 = vunpack.c.l.b16 %v145
    %v418 = vunpack.c.h.b16 %v145
    %v419 = vunpack.c.l.b16 %v146
    %v420 = vunpack.c.h.b16 %v146
    %v421 = vunpack.c.l.b16 %v147
    %v422 = vunpack.c.h.b16 %v147
    %v423 = vunpack.c.l.b16 %v148
    %v424 = vunpack.c.h.b16 %v148
    %v425 = vunpack.c.l.b16 %v149
    %v426 = vunpack.c.h.b16 %v149
    %v427 = vunpack.c.l.b16 %v150
    %v428 = vunpack.c.h.b16 %v150
    %v429 = vunpack.c.l.b16 %v151
    %v430 = vunpack.c.h.b16 %v151
    %v431 = vunpack.c.l.b16 %v152
    %v432 = vunpack.c.h.b16 %v152
    %v433 = vunpack.c.l.b16 %v153
    %v434 = vunpack.c.h.b16 %v153
    %v435 = vunpack.c.l.b16 %v154
    %v436 = vunpack.c.h.b16 %v154
    %v437 = vunpack.c.l.b16 %v155
    %v438 = vunpack.c.h.b16 %v155
    %v439 = vunpack.c.l.b16 %v156
    %v440 = vunpack.c.h.b16 %v156
    %v441 = vunpack.c.l.b16 %v157
    %v442 = vunpack.c.h.b16 %v157
    %v443 = vunpack.c.l.b16 %v158
    %v444 = vunpack.c.h.b16 %v158
    %v445 = vunpack.c.l.b16 %v159
    %v446 = vunpack.c.h.b16 %v159
    %v447 = vunpack.c.l.b16 %v160
    %v448 = vunpack.c.h.b16 %v160
    %v449 = vunpack.c.l.b16 %v161
    %v450 = vunpack.c.h.b16 %v161
    %v451 = vunpack.c.l.b16 %v162
    %v452 = vunpack.c.h.b16 %v162
    %v453 = vunpack.c.l.b16 %v163
    %v454 = vunpack.c.h.b16 %v163
    %v455 = vunpack.c.l.b16 %v164
    %v456 = vunpack.c.h.b16 %v164
    %v457 = vunpack.c.l.b16 %v165
    %v458 = vunpack.c.h.b16 %v165
    %v459 = vunpack.c.l.b16 %v166
    %v460 = vunpack.c.h.b16 %v166
    %v461 = vunpack.c.l.b16 %v167
    %v462 = vunpack.c.h.b16 %v167
    %v463 = vunpack.c.l.b16 %v168
    %v464 = vunpack.c.h.b16 %v168
    %v465 = vunpack.c.l.b16 %v169
    %v466 = vunpack.c.h.b16 %v169
    %v467 = vunpack.c.l.b16 %v170
    %v468 = vunpack.c.h.b16 %v170
    %v469 = vunpack.c.l.b16 %v171
    %v470 = vunpack.c.h.b16 %v171
    %v471 = vunpack.c.l.b16 %v172
    %v472 = vunpack.c.h.b16 %v172
    %v473 = vunpack.c.l.b16 %v173
    %v474 = vunpack.c.h.b16 %v173
    %v475 = vunpack.c.l.b16 %v174
    %v476 = vunpack.c.h.b16 %v174
    %v477 = vunpack.c.l.b16 %v175
    %v478 = vunpack.c.h.b16 %v175
    %v479 = vunpack.c.l.b16 %v176
    %v480 = vunpack.c.h.b16 %v176
    %v481 = vunpack.c.l.b16 %v177
    %v482 = vunpack.c.h.b16 %v177
    %v483 = vunpack.c.l.b16 %v178
    %v484 = vunpack.c.h.b16 %v178
    %v485 = vunpack.c.l.b16 %v179
    %v486 = vunpack.c.h.b16 %v179
    %v487 = vunpack.c.l.b16 %v180
    %v488 = vunpack.c.h.b16 %v180
    %v489 = vunpack.c.l.b16 %v181
    %v490 = vunpack.c.h.b16 %v181
    %v491 = vunpack.c.l.b16 %v182
    %v492 = vunpack.c.h.b16 %v182
    %v493 = vunpack.c.l.b16 %v183
    %v494 = vunpack.c.h.b16 %v183
    %v495 = vunpack.c.l.b16 %v184
    %v496 = vunpack.c.h.b16 %v184
    %v497 = vunpack.c.l.b16 %v185
    %v498 = vunpack.c.h.b16 %v185
    %v499 = vunpack.c.l.b16 %v186
    %v500 = vunpack.c.h.b16 %v186
    %v501 = vunpack.c.l.b16 %v187
    %v502 = vunpack.c.h.b16 %v187
    %v503 = vunpack.c.l.b16 %v188
    %v504 = vunpack.c.h.b16 %v188
    %v505 = vunpack.c.l.b16 %v189
    %v506 = vunpack.c.h.b16 %v189
    %v507 = vunpack.c.l.b16 %v190
    %v508 = vunpack.c.h.b16 %v190
    %v509 = vunpack.c.l.b16 %v191
    %v510 = vunpack.c.h.b16 %v191
    %v511 = vunpack.c.l.b16 %v192
    %v512 = vunpack.c.h.b16 %v192
    %v513 = vpack.c.b16 %v323, %v321
    %v514 = vpack.c.b16 %v324, %v322
    %v515 = vpack.c.b16 %v327, %v325
    %v516 = vpack.c.b16 %v328, %v326
    %v517 = vpack.c.b16 %v331, %v329
    %v518 = vpack.c.b16 %v332, %v330
    %v519 = vpack.c.b16 %v335, %v333
    %v520 = vpack.c.b16 %v336, %v334
    %v521 = vpack.c.b16 %v339, %v337
    %v522 = vpack.c.b16 %v340, %v338
    %v523 = vpack.c.b16 %v343, %v341
    %v524 = vpack.c.b16 %v344, %v342
    %v525 = vpack.c.b16 %v347, %v345
    %v526 = vpack.c.b16 %v348, %v346
    %v527 = vpack.c.b16 %v351, %v349
    %v528 = vpack.c.b16 %v352, %v350
    %v529 = vpack.c.b16 %v355, %v353
    %v530 = vpack.c.b16 %v356, %v354
    %v531 = vpack.c.b16 %v359, %v357
    %v532 = vpack.c.b16 %v360, %v358
    %v533 = vpack.c.b16 %v363, %v361
    %v534 = vpack.c.b16 %v364, %v362
    %v535 = vpack.c.b16 %v367, %v365
    %v536 = vpack.c.b16 %v368, %v366
    %v537 = vpack.c.b16 %v371, %v369
    %v538 = vpack.c.b16 %v372, %v370
    %v539 = vpack.c.b16 %v375, %v373
    %v540 = vpack.c.b16 %v376, %v374
    %v541 = vpack.c.b16 %v379, %v377
    %v542 = vpack.c.b16 %v380, %v378
    %v543 = vpack.c.b16 %v383, %v381
    %v544 = vpack.c.b16 %v384, %v382
    %v545 = vpack.c.b16 %v387, %v385
    %v546 = vpack.c.b16 %v388, %v386
    %v547 = vpack.c.b16 %v391, %v389
    %v548 = vpack.c.b16 %v392, %v390
    %v549 = vpack.c.b16 %v395, %v393
    %v550 = vpack.c.b16 %v396, %v394
    %v551 = vpack.c.b16 %v399, %v397
    %v552 = vpack.c.b16 %v400, %v398
    %v553 = vpack.c.b16 %v403, %v401
    %v554 = vpack.c.b16 %v404, %v402
    %v555 = vpack.c.b16 %v407, %v405
    %v556 = vpack.c.b16 %v408, %v406
    %v557 = vpack.c.b16 %v411, %v409
    %v558 = vpack.c.b16 %v412, %v410
    %v559 = vpack.c.b16 %v415, %v413
    %v560 = vpack.c.b16 %v416, %v414
    %v561 = vpack.c.b16 %v419, %v417
    %v562 = vpack.c.b16 %v420, %v418
    %v563 = vpack.c.b16 %v423, %v421
    %v564 = vpack.c.b16 %v424, %v422
    %v565 = vpack.c.b16 %v427, %v425
    %v566 = vpack.c.b16 %v428, %v426
    %v567 = vpack.c.b16 %v431, %v429
    %v568 = vpack.c.b16 %v432, %v430
    %v569 = vpack.c.b16 %v435, %v433
    %v570 = vpack.c.b16 %v436, %v434
    %v571 = vpack.c.b16 %v439, %v437
    %v572 = vpack.c.b16 %v440, %v438
    %v573 = vpack.c.b16 %v443, %v441
    %v574 = vpack.c.b16 %v444, %v442
    %v575 = vpack.c.b16 %v447, %v445
    %v576 = vpack.c.b16 %v448, %v446
    %v577 = vpack.c.b16 %v451, %v449
    %v578 = vpack.c.b16 %v452, %v450
    %v579 = vpack.c.b16 %v455, %v453
    %v580 = vpack.c.b16 %v456, %v454
    %v581 = vpack.c.b16 %v459, %v457
    %v582 = vpack.c.b16 %v460, %v458
    %v583 = vpack.c.b16 %v463, %v461
    %v584 = vpack.c.b16 %v464, %v462
    %v585 = vpack.c.b16 %v467, %v465
    %v586 = vpack.c.b16 %v468, %v466
    %v587 = vpack.c.b16 %v471, %v469
    %v588 = vpack.c.b16 %v472, %v470
    %v589 = vpack.c.b16 %v475, %v473
    %v590 = vpack.c.b16 %v476, %v474
    %v591 = vpack.c.b16 %v479, %v477
    %v592 = vpack.c.b16 %v480, %v478
    %v593 = vpack.c.b16 %v483, %v481
    %v594 = vpack.c.b16 %v484, %v482
    %v595 = vpack.c.b16 %v487, %v485
    %v596 = vpack.c.b16 %v488, %v486
    %v597 = vpack.c.b16 %v491, %v489
    %v598 = vpack.c.b16 %v492, %v490
    %v599 = vpack.c.b16 %v495, %v493
    %v600 = vpack.c.b16 %v496, %v494
    %v601 = vpack.c.b16 %v499, %v497
    %v602 = vpack.c.b16 %v500, %v498
    %v603 = vpack.c.b16 %v503, %v501
    %v604 = vpack.c.b16 %v504, %v502
    %v605 = vpack.c.b16 %v507, %v505
    %v606 = vpack.c.b16 %v508, %v506
    %v607 = vpack.c.b16 %v511, %v509
    %v608 = vpack.c.b16 %v512, %v510
    %705 = vmatprep.subr.bf16.mxu0 %v514
    %706 = vmatpush1.bf16.msra.mxu0 %v513
    %707 = vmatprep.subr.bf16.mxu0 %v516
    %708 = vmatpush1.bf16.msra.mxu0 %v515
    %709 = vmatprep.subr.bf16.mxu0 %v518
    %710 = vmatpush1.bf16.msra.mxu0 %v517
    %711 = vmatprep.subr.bf16.mxu0 %v520
    %712 = vmatpush1.bf16.msra.mxu0 %v519
    %713 = vmatprep.subr.bf16.mxu0 %v522
    %714 = vmatpush1.bf16.msra.mxu0 %v521
    %715 = vmatprep.subr.bf16.mxu0 %v524
    %716 = vmatpush1.bf16.msra.mxu0 %v523
    %717 = vmatprep.subr.bf16.mxu0 %v526
    %718 = vmatpush1.bf16.msra.mxu0 %v525
    %719 = vmatprep.subr.bf16.mxu0 %v528
    %720 = vmatpush1.bf16.msra.mxu0 %v527
    %721 = vmatprep.subr.bf16.mxu0 %v530
    %722 = vmatpush1.bf16.msra.mxu0 %v529
    %723 = vmatprep.subr.bf16.mxu0 %v532
    %724 = vmatpush1.bf16.msra.mxu0 %v531
    %725 = vmatprep.subr.bf16.mxu0 %v534
    %726 = vmatpush1.bf16.msra.mxu0 %v533
    %727 = vmatprep.subr.bf16.mxu0 %v536
    %728 = vmatpush1.bf16.msra.mxu0 %v535
    %729 = vmatprep.subr.bf16.mxu0 %v538
    %730 = vmatpush1.bf16.msra.mxu0 %v537
    %731 = vmatprep.subr.bf16.mxu0 %v540
    %732 = vmatpush1.bf16.msra.mxu0 %v539
    %733 = vmatprep.subr.bf16.mxu0 %v542
    %734 = vmatpush1.bf16.msra.mxu0 %v541
    %735 = vmatprep.subr.bf16.mxu0 %v544
    %736 = vmatpush1.bf16.msra.mxu0 %v543
    %737 = vmatprep.mubr.bf16.mxu0 %v214
    %738 = vmatmul.mubr.bf16.gmra.mrb[0].mxu0 %v213
    %v739 = vpop.f32.mrb[0].mxu0
    %v740 = vadd.f32 %v197, %v739
    %v741 = vpop.f32.mrb[0].mxu0
    %v742 = vadd.f32 %v201, %v741
    %v743 = vpop.f32.mrb[0].mxu0
    %v744 = vpop.f32.mrb[0].mxu0
    %745 = vdwg.mxu0
    %746 = vmatprep.subr.bf16.mxu0 %v546
    %747 = vmatpush1.bf16.msra.mxu0 %v545
    %748 = vmatprep.subr.bf16.mxu0 %v548
    %749 = vmatpush1.bf16.msra.mxu0 %v547
    %750 = vmatprep.subr.bf16.mxu0 %v550
    %751 = vmatpush1.bf16.msra.mxu0 %v549
    %752 = vmatprep.subr.bf16.mxu0 %v552
    %753 = vmatpush1.bf16.msra.mxu0 %v551
    %754 = vmatprep.subr.bf16.mxu0 %v554
    %755 = vmatpush1.bf16.msra.mxu0 %v553
    %756 = vmatprep.subr.bf16.mxu0 %v556
    %757 = vmatpush1.bf16.msra.mxu0 %v555
    %758 = vmatprep.subr.bf16.mxu0 %v558
    %759 = vmatpush1.bf16.msra.mxu0 %v557
    %760 = vmatprep.subr.bf16.mxu0 %v560
    %761 = vmatpush1.bf16.msra.mxu0 %v559
    %762 = vmatprep.subr.bf16.mxu0 %v562
    %763 = vmatpush1.bf16.msra.mxu0 %v561
    %764 = vmatprep.subr.bf16.mxu0 %v564
    %765 = vmatpush1.bf16.msra.mxu0 %v563
    %766 = vmatprep.subr.bf16.mxu0 %v566
    %767 = vmatpush1.bf16.msra.mxu0 %v565
    %768 = vmatprep.subr.bf16.mxu0 %v568
    %769 = vmatpush1.bf16.msra.mxu0 %v567
    %770 = vmatprep.subr.bf16.mxu0 %v570
    %771 = vmatpush1.bf16.msra.mxu0 %v569
    %772 = vmatprep.subr.bf16.mxu0 %v572
    %773 = vmatpush1.bf16.msra.mxu0 %v571
    %774 = vmatprep.subr.bf16.mxu0 %v574
    %775 = vmatpush1.bf16.msra.mxu0 %v573
    %776 = vmatprep.subr.bf16.mxu0 %v576
    %777 = vmatpush1.bf16.msra.mxu0 %v575
    %778 = vmatprep.mubr.bf16.mxu0 %v216
    %779 = vmatmul.mubr.bf16.gmra.mrb[0].mxu0 %v215
    %v780 = vpop.f32.mrb[0].mxu0
    %v781 = vadd.f32 %v740, %v780
    %v782 = vpop.f32.mrb[0].mxu0
    %v783 = vadd.f32 %v742, %v782
    %v784 = vpop.f32.mrb[0].mxu0
    %v785 = vpop.f32.mrb[0].mxu0
    %786 = vdwg.mxu0
    %787 = vmatprep.subr.bf16.mxu0 %v578
    %788 = vmatpush1.bf16.msra.mxu0 %v577
    %789 = vmatprep.subr.bf16.mxu0 %v580
    %790 = vmatpush1.bf16.msra.mxu0 %v579
    %791 = vmatprep.subr.bf16.mxu0 %v582
    %792 = vmatpush1.bf16.msra.mxu0 %v581
    %793 = vmatprep.subr.bf16.mxu0 %v584
    %794 = vmatpush1.bf16.msra.mxu0 %v583
    %795 = vmatprep.subr.bf16.mxu0 %v586
    %796 = vmatpush1.bf16.msra.mxu0 %v585
    %797 = vmatprep.subr.bf16.mxu0 %v588
    %798 = vmatpush1.bf16.msra.mxu0 %v587
    %799 = vmatprep.subr.bf16.mxu0 %v590
    %800 = vmatpush1.bf16.msra.mxu0 %v589
    %801 = vmatprep.subr.bf16.mxu0 %v592
    %802 = vmatpush1.bf16.msra.mxu0 %v591
    %803 = vmatprep.subr.bf16.mxu0 %v594
    %804 = vmatpush1.bf16.msra.mxu0 %v593
    %805 = vmatprep.subr.bf16.mxu0 %v596
    %806 = vmatpush1.bf16.msra.mxu0 %v595
    %807 = vmatprep.subr.bf16.mxu0 %v598
    %808 = vmatpush1.bf16.msra.mxu0 %v597
    %809 = vmatprep.subr.bf16.mxu0 %v600
    %810 = vmatpush1.bf16.msra.mxu0 %v599
    %811 = vmatprep.subr.bf16.mxu0 %v602
    %812 = vmatpush1.bf16.msra.mxu0 %v601
    %813 = vmatprep.subr.bf16.mxu0 %v604
    %814 = vmatpush1.bf16.msra.mxu0 %v603
    %815 = vmatprep.subr.bf16.mxu0 %v606
    %816 = vmatpush1.bf16.msra.mxu0 %v605
    %817 = vmatprep.subr.bf16.mxu0 %v608
    %818 = vmatpush1.bf16.msra.mxu0 %v607
    %819 = vmatprep.mubr.bf16.mxu0 %v218
    %820 = vmatmul.mubr.bf16.gmra.mrb[0].mxu0 %v217
    %v821 = vpop.f32.mrb[0].mxu0
    %v822 = vadd.f32 %v781, %v821
    %v823 = vpop.f32.mrb[0].mxu0
    %v824 = vadd.f32 %v783, %v823
    %v825 = vpop.f32.mrb[0].mxu0
    %v826 = vpop.f32.mrb[0].mxu0
    %827 = vdwg.mxu0
    %v828 = vld [vmem:[#allocation8] sm:$0xff]
    %v829 = vld [vmem:[#allocation8 + $0x8] sm:$0xff]
    %v830 = vld [vmem:[#allocation8 + $0x10] sm:$0xff]
    %v831 = vld [vmem:[#allocation8 + $0x18] sm:$0xff]
    %v832 = vld [vmem:[#allocation8 + $0x20] sm:$0xff]
    %v833 = vld [vmem:[#allocation8 + $0x28] sm:$0xff]
    %v834 = vld [vmem:[#allocation8 + $0x30] sm:$0xff]
    %v835 = vld [vmem:[#allocation8 + $0x38] sm:$0xff]
    %v836 = vld [vmem:[#allocation8 + $0x40] sm:$0xff]
    %v837 = vld [vmem:[#allocation8 + $0x48] sm:$0xff]
    %v838 = vld [vmem:[#allocation8 + $0x50] sm:$0xff]
    %v839 = vld [vmem:[#allocation8 + $0x58] sm:$0xff]
    %v840 = vld [vmem:[#allocation8 + $0x60] sm:$0xff]
    %v841 = vld [vmem:[#allocation8 + $0x68] sm:$0xff]
    %v842 = vld [vmem:[#allocation8 + $0x70] sm:$0xff]
    %v843 = vld [vmem:[#allocation8 + $0x78] sm:$0xff]
    %v844 = vld [vmem:[#allocation8 + $0x80] sm:$0xff]
    %v845 = vld [vmem:[#allocation8 + $0x88] sm:$0xff]
    %v846 = vld [vmem:[#allocation8 + $0x90] sm:$0xff]
    %v847 = vld [vmem:[#allocation8 + $0x98] sm:$0xff]
    %v848 = vld [vmem:[#allocation8 + $0xa0] sm:$0xff]
    %v849 = vld [vmem:[#allocation8 + $0xa8] sm:$0xff]
    %v850 = vld [vmem:[#allocation8 + $0xb0] sm:$0xff]
    %v851 = vld [vmem:[#allocation8 + $0xb8] sm:$0xff]
    %v852 = vld [vmem:[#allocation8 + $0xc0] sm:$0xff]
    %v853 = vld [vmem:[#allocation8 + $0xc8] sm:$0xff]
    %v854 = vld [vmem:[#allocation8 + $0xd0] sm:$0xff]
    %v855 = vld [vmem:[#allocation8 + $0xd8] sm:$0xff]
    %v856 = vld [vmem:[#allocation8 + $0xe0] sm:$0xff]
    %v857 = vld [vmem:[#allocation8 + $0xe8] sm:$0xff]
    %v858 = vld [vmem:[#allocation8 + $0xf0] sm:$0xff]
    %v859 = vld [vmem:[#allocation8 + $0xf8] sm:$0xff]
    %v860 = vld [vmem:[#allocation8 + $0x100] sm:$0xff]
    %v861 = vld [vmem:[#allocation8 + $0x108] sm:$0xff]
    %v862 = vld [vmem:[#allocation8 + $0x110] sm:$0xff]
    %v863 = vld [vmem:[#allocation8 + $0x118] sm:$0xff]
    %v864 = vld [vmem:[#allocation8 + $0x120] sm:$0xff]
    %v865 = vld [vmem:[#allocation8 + $0x128] sm:$0xff]
    %v866 = vld [vmem:[#allocation8 + $0x130] sm:$0xff]
    %v867 = vld [vmem:[#allocation8 + $0x138] sm:$0xff]
    %v868 = vld [vmem:[#allocation8 + $0x140] sm:$0xff]
    %v869 = vld [vmem:[#allocation8 + $0x148] sm:$0xff]
    %v870 = vld [vmem:[#allocation8 + $0x150] sm:$0xff]
    %v871 = vld [vmem:[#allocation8 + $0x158] sm:$0xff]
    %v872 = vld [vmem:[#allocation8 + $0x160] sm:$0xff]
    %v873 = vld [vmem:[#allocation8 + $0x168] sm:$0xff]
    %v874 = vld [vmem:[#allocation8 + $0x170] sm:$0xff]
    %v875 = vld [vmem:[#allocation8 + $0x178] sm:$0xff]
    %v876 = vld [vmem:[#allocation8 + $0x180] sm:$0xff]
    %v877 = vld [vmem:[#allocation8 + $0x188] sm:$0xff]
    %v878 = vld [vmem:[#allocation8 + $0x190] sm:$0xff]
    %v879 = vld [vmem:[#allocation8 + $0x198] sm:$0xff]
    %v880 = vld [vmem:[#allocation8 + $0x1a0] sm:$0xff]
    %v881 = vld [vmem:[#allocation8 + $0x1a8] sm:$0xff]
    %v882 = vld [vmem:[#allocation8 + $0x1b0] sm:$0xff]
    %v883 = vld [vmem:[#allocation8 + $0x1b8] sm:$0xff]
    %v884 = vld [vmem:[#allocation8 + $0x1c0] sm:$0xff]
    %v885 = vld [vmem:[#allocation8 + $0x1c8] sm:$0xff]
    %v886 = vld [vmem:[#allocation8 + $0x1d0] sm:$0xff]
    %v887 = vld [vmem:[#allocation8 + $0x1d8] sm:$0xff]
    %v888 = vld [vmem:[#allocation8 + $0x1e0] sm:$0xff]
    %v889 = vld [vmem:[#allocation8 + $0x1e8] sm:$0xff]
    %v890 = vld [vmem:[#allocation8 + $0x1f0] sm:$0xff]
    %v891 = vld [vmem:[#allocation8 + $0x1f8] sm:$0xff]
    %v892 = vld [vmem:[#allocation8 + $0x200] sm:$0xff]
    %v893 = vld [vmem:[#allocation8 + $0x208] sm:$0xff]
    %v894 = vld [vmem:[#allocation8 + $0x210] sm:$0xff]
    %v895 = vld [vmem:[#allocation8 + $0x218] sm:$0xff]
    %v896 = vld [vmem:[#allocation8 + $0x220] sm:$0xff]
    %v897 = vld [vmem:[#allocation8 + $0x228] sm:$0xff]
    %v898 = vld [vmem:[#allocation8 + $0x230] sm:$0xff]
    %v899 = vld [vmem:[#allocation8 + $0x238] sm:$0xff]
    %v900 = vld [vmem:[#allocation8 + $0x240] sm:$0xff]
    %v901 = vld [vmem:[#allocation8 + $0x248] sm:$0xff]
    %v902 = vld [vmem:[#allocation8 + $0x250] sm:$0xff]
    %v903 = vld [vmem:[#allocation8 + $0x258] sm:$0xff]
    %v904 = vld [vmem:[#allocation8 + $0x260] sm:$0xff]
    %v905 = vld [vmem:[#allocation8 + $0x268] sm:$0xff]
    %v906 = vld [vmem:[#allocation8 + $0x270] sm:$0xff]
    %v907 = vld [vmem:[#allocation8 + $0x278] sm:$0xff]
    %v908 = vld [vmem:[#allocation8 + $0x280] sm:$0xff]
    %v909 = vld [vmem:[#allocation8 + $0x288] sm:$0xff]
    %v910 = vld [vmem:[#allocation8 + $0x290] sm:$0xff]
    %v911 = vld [vmem:[#allocation8 + $0x298] sm:$0xff]
    %v912 = vld [vmem:[#allocation8 + $0x2a0] sm:$0xff]
    %v913 = vld [vmem:[#allocation8 + $0x2a8] sm:$0xff]
    %v914 = vld [vmem:[#allocation8 + $0x2b0] sm:$0xff]
    %v915 = vld [vmem:[#allocation8 + $0x2b8] sm:$0xff]
    %v916 = vld [vmem:[#allocation8 + $0x2c0] sm:$0xff]
    %v917 = vld [vmem:[#allocation8 + $0x2c8] sm:$0xff]
    %v918 = vld [vmem:[#allocation8 + $0x2d0] sm:$0xff]
    %v919 = vld [vmem:[#allocation8 + $0x2d8] sm:$0xff]
    %v920 = vld [vmem:[#allocation8 + $0x2e0] sm:$0xff]
    %v921 = vld [vmem:[#allocation8 + $0x2e8] sm:$0xff]
    %v922 = vld [vmem:[#allocation8 + $0x2f0] sm:$0xff]
    %v923 = vld [vmem:[#allocation8 + $0x2f8] sm:$0xff]
    %v924 = vld [vmem:[#allocation8 + $0x300] sm:$0xff]
    %v925 = vld [vmem:[#allocation8 + $0x308] sm:$0xff]
    %v926 = vld [vmem:[#allocation8 + $0x310] sm:$0xff]
    %v927 = vld [vmem:[#allocation8 + $0x318] sm:$0xff]
    %v928 = vld [vmem:[#allocation8 + $0x320] sm:$0xff]
    %v929 = vld [vmem:[#allocation8 + $0x328] sm:$0xff]
    %v930 = vld [vmem:[#allocation8 + $0x330] sm:$0xff]
    %v931 = vld [vmem:[#allocation8 + $0x338] sm:$0xff]
    %v932 = vld [vmem:[#allocation8 + $0x340] sm:$0xff]
    %v933 = vld [vmem:[#allocation8 + $0x348] sm:$0xff]
    %v934 = vld [vmem:[#allocation8 + $0x350] sm:$0xff]
    %v935 = vld [vmem:[#allocation8 + $0x358] sm:$0xff]
    %v936 = vld [vmem:[#allocation8 + $0x360] sm:$0xff]
    %v937 = vld [vmem:[#allocation8 + $0x368] sm:$0xff]
    %v938 = vld [vmem:[#allocation8 + $0x370] sm:$0xff]
    %v939 = vld [vmem:[#allocation8 + $0x378] sm:$0xff]
    %v940 = vld [vmem:[#allocation8 + $0x380] sm:$0xff]
    %v941 = vld [vmem:[#allocation8 + $0x388] sm:$0xff]
    %v942 = vld [vmem:[#allocation8 + $0x390] sm:$0xff]
    %v943 = vld [vmem:[#allocation8 + $0x398] sm:$0xff]
    %v944 = vld [vmem:[#allocation8 + $0x3a0] sm:$0xff]
    %v945 = vld [vmem:[#allocation8 + $0x3a8] sm:$0xff]
    %v946 = vld [vmem:[#allocation8 + $0x3b0] sm:$0xff]
    %v947 = vld [vmem:[#allocation8 + $0x3b8] sm:$0xff]
    %v948 = vld [vmem:[#allocation8 + $0x3c0] sm:$0xff]
    %v949 = vld [vmem:[#allocation8 + $0x3c8] sm:$0xff]
    %v950 = vld [vmem:[#allocation8 + $0x3d0] sm:$0xff]
    %v951 = vld [vmem:[#allocation8 + $0x3d8] sm:$0xff]
    %v952 = vld [vmem:[#allocation8 + $0x3e0] sm:$0xff]
    %v953 = vld [vmem:[#allocation8 + $0x3e8] sm:$0xff]
    %v954 = vld [vmem:[#allocation8 + $0x3f0] sm:$0xff]
    %v955 = vld [vmem:[#allocation8 + $0x3f8] sm:$0xff]
    %v957 = vlaneseq
    %v958 = vshrl.u32 %v957, 7
    %v959 = vsub.s32 0, %v958
    %v960 = vrot.slane %v90, %v959
    %v961 = vlaneseq
    %v962 = vshrl.u32 %v961, 7
    %v963 = vsub.s32 1, %v962
    %v964 = vrot.slane %v90, %v963
    %v965 = vlaneseq
    %v966 = vshrl.u32 %v965, 7
    %v967 = vsub.s32 2, %v966
    %v968 = vrot.slane %v90, %v967
    %v969 = vlaneseq
    %v970 = vshrl.u32 %v969, 7
    %v971 = vsub.s32 3, %v970
    %v972 = vrot.slane %v90, %v971
    %v979 = vunpack.c.l.b16 %v95
    %v980 = vunpack.c.h.b16 %v95
    %v981 = vunpack.c.l.b16 %v96
    %v982 = vunpack.c.h.b16 %v96
    %v983 = vpack.c.b16 %v979, %v979
    %v984 = vpack.c.b16 %v980, %v980
    %v985 = vpack.c.b16 %v981, %v981
    %v986 = vpack.c.b16 %v982, %v982
    %v1119 = vunpack.c.l.b16 %v828
    %v1120 = vunpack.c.h.b16 %v828
    %v1121 = vunpack.c.l.b16 %v829
    %v1122 = vunpack.c.h.b16 %v829
    %v1123 = vunpack.c.l.b16 %v830
    %v1124 = vunpack.c.h.b16 %v830
    %v1125 = vunpack.c.l.b16 %v831
    %v1126 = vunpack.c.h.b16 %v831
    %v1127 = vunpack.c.l.b16 %v832
    %v1128 = vunpack.c.h.b16 %v832
    %v1129 = vunpack.c.l.b16 %v833
    %v1130 = vunpack.c.h.b16 %v833
    %v1131 = vunpack.c.l.b16 %v834
    %v1132 = vunpack.c.h.b16 %v834
    %v1133 = vunpack.c.l.b16 %v835
    %v1134 = vunpack.c.h.b16 %v835
    %v1135 = vunpack.c.l.b16 %v836
    %v1136 = vunpack.c.h.b16 %v836
    %v1137 = vunpack.c.l.b16 %v837
    %v1138 = vunpack.c.h.b16 %v837
    %v1139 = vunpack.c.l.b16 %v838
    %v1140 = vunpack.c.h.b16 %v838
    %v1141 = vunpack.c.l.b16 %v839
    %v1142 = vunpack.c.h.b16 %v839
    %v1143 = vunpack.c.l.b16 %v840
    %v1144 = vunpack.c.h.b16 %v840
    %v1145 = vunpack.c.l.b16 %v841
    %v1146 = vunpack.c.h.b16 %v841
    %v1147 = vunpack.c.l.b16 %v842
    %v1148 = vunpack.c.h.b16 %v842
    %v1149 = vunpack.c.l.b16 %v843
    %v1150 = vunpack.c.h.b16 %v843
    %v1151 = vunpack.c.l.b16 %v844
    %v1152 = vunpack.c.h.b16 %v844
    %v1153 = vunpack.c.l.b16 %v845
    %v1154 = vunpack.c.h.b16 %v845
    %v1155 = vunpack.c.l.b16 %v846
    %v1156 = vunpack.c.h.b16 %v846
    %v1157 = vunpack.c.l.b16 %v847
    %v1158 = vunpack.c.h.b16 %v847
    %v1159 = vunpack.c.l.b16 %v848
    %v1160 = vunpack.c.h.b16 %v848
    %v1161 = vunpack.c.l.b16 %v849
    %v1162 = vunpack.c.h.b16 %v849
    %v1163 = vunpack.c.l.b16 %v850
    %v1164 = vunpack.c.h.b16 %v850
    %v1165 = vunpack.c.l.b16 %v851
    %v1166 = vunpack.c.h.b16 %v851
    %v1167 = vunpack.c.l.b16 %v852
    %v1168 = vunpack.c.h.b16 %v852
    %v1169 = vunpack.c.l.b16 %v853
    %v1170 = vunpack.c.h.b16 %v853
    %v1171 = vunpack.c.l.b16 %v854
    %v1172 = vunpack.c.h.b16 %v854
    %v1173 = vunpack.c.l.b16 %v855
    %v1174 = vunpack.c.h.b16 %v855
    %v1175 = vunpack.c.l.b16 %v856
    %v1176 = vunpack.c.h.b16 %v856
    %v1177 = vunpack.c.l.b16 %v857
    %v1178 = vunpack.c.h.b16 %v857
    %v1179 = vunpack.c.l.b16 %v858
    %v1180 = vunpack.c.h.b16 %v858
    %v1181 = vunpack.c.l.b16 %v859
    %v1182 = vunpack.c.h.b16 %v859
    %v1183 = vunpack.c.l.b16 %v860
    %v1184 = vunpack.c.h.b16 %v860
    %v1185 = vunpack.c.l.b16 %v861
    %v1186 = vunpack.c.h.b16 %v861
    %v1187 = vunpack.c.l.b16 %v862
    %v1188 = vunpack.c.h.b16 %v862
    %v1189 = vunpack.c.l.b16 %v863
    %v1190 = vunpack.c.h.b16 %v863
    %v1191 = vunpack.c.l.b16 %v864
    %v1192 = vunpack.c.h.b16 %v864
    %v1193 = vunpack.c.l.b16 %v865
    %v1194 = vunpack.c.h.b16 %v865
    %v1195 = vunpack.c.l.b16 %v866
    %v1196 = vunpack.c.h.b16 %v866
    %v1197 = vunpack.c.l.b16 %v867
    %v1198 = vunpack.c.h.b16 %v867
    %v1199 = vunpack.c.l.b16 %v868
    %v1200 = vunpack.c.h.b16 %v868
    %v1201 = vunpack.c.l.b16 %v869
    %v1202 = vunpack.c.h.b16 %v869
    %v1203 = vunpack.c.l.b16 %v870
    %v1204 = vunpack.c.h.b16 %v870
    %v1205 = vunpack.c.l.b16 %v871
    %v1206 = vunpack.c.h.b16 %v871
    %v1207 = vunpack.c.l.b16 %v872
    %v1208 = vunpack.c.h.b16 %v872
    %v1209 = vunpack.c.l.b16 %v873
    %v1210 = vunpack.c.h.b16 %v873
    %v1211 = vunpack.c.l.b16 %v874
    %v1212 = vunpack.c.h.b16 %v874
    %v1213 = vunpack.c.l.b16 %v875
    %v1214 = vunpack.c.h.b16 %v875
    %v1215 = vunpack.c.l.b16 %v876
    %v1216 = vunpack.c.h.b16 %v876
    %v1217 = vunpack.c.l.b16 %v877
    %v1218 = vunpack.c.h.b16 %v877
    %v1219 = vunpack.c.l.b16 %v878
    %v1220 = vunpack.c.h.b16 %v878
    %v1221 = vunpack.c.l.b16 %v879
    %v1222 = vunpack.c.h.b16 %v879
    %v1223 = vunpack.c.l.b16 %v880
    %v1224 = vunpack.c.h.b16 %v880
    %v1225 = vunpack.c.l.b16 %v881
    %v1226 = vunpack.c.h.b16 %v881
    %v1227 = vunpack.c.l.b16 %v882
    %v1228 = vunpack.c.h.b16 %v882
    %v1229 = vunpack.c.l.b16 %v883
    %v1230 = vunpack.c.h.b16 %v883
    %v1231 = vunpack.c.l.b16 %v884
    %v1232 = vunpack.c.h.b16 %v884
    %v1233 = vunpack.c.l.b16 %v885
    %v1234 = vunpack.c.h.b16 %v885
    %v1235 = vunpack.c.l.b16 %v886
    %v1236 = vunpack.c.h.b16 %v886
    %v1237 = vunpack.c.l.b16 %v887
    %v1238 = vunpack.c.h.b16 %v887
    %v1239 = vunpack.c.l.b16 %v888
    %v1240 = vunpack.c.h.b16 %v888
    %v1241 = vunpack.c.l.b16 %v889
    %v1242 = vunpack.c.h.b16 %v889
    %v1243 = vunpack.c.l.b16 %v890
    %v1244 = vunpack.c.h.b16 %v890
    %v1245 = vunpack.c.l.b16 %v891
    %v1246 = vunpack.c.h.b16 %v891
    %v1247 = vunpack.c.l.b16 %v892
    %v1248 = vunpack.c.h.b16 %v892
    %v1249 = vunpack.c.l.b16 %v893
    %v1250 = vunpack.c.h.b16 %v893
    %v1251 = vunpack.c.l.b16 %v894
    %v1252 = vunpack.c.h.b16 %v894
    %v1253 = vunpack.c.l.b16 %v895
    %v1254 = vunpack.c.h.b16 %v895
    %v1255 = vunpack.c.l.b16 %v896
    %v1256 = vunpack.c.h.b16 %v896
    %v1257 = vunpack.c.l.b16 %v897
    %v1258 = vunpack.c.h.b16 %v897
    %v1259 = vunpack.c.l.b16 %v898
    %v1260 = vunpack.c.h.b16 %v898
    %v1261 = vunpack.c.l.b16 %v899
    %v1262 = vunpack.c.h.b16 %v899
    %v1263 = vunpack.c.l.b16 %v900
    %v1264 = vunpack.c.h.b16 %v900
    %v1265 = vunpack.c.l.b16 %v901
    %v1266 = vunpack.c.h.b16 %v901
    %v1267 = vunpack.c.l.b16 %v902
    %v1268 = vunpack.c.h.b16 %v902
    %v1269 = vunpack.c.l.b16 %v903
    %v1270 = vunpack.c.h.b16 %v903
    %v1271 = vunpack.c.l.b16 %v904
    %v1272 = vunpack.c.h.b16 %v904
    %v1273 = vunpack.c.l.b16 %v905
    %v1274 = vunpack.c.h.b16 %v905
    %v1275 = vunpack.c.l.b16 %v906
    %v1276 = vunpack.c.h.b16 %v906
    %v1277 = vunpack.c.l.b16 %v907
    %v1278 = vunpack.c.h.b16 %v907
    %v1279 = vunpack.c.l.b16 %v908
    %v1280 = vunpack.c.h.b16 %v908
    %v1281 = vunpack.c.l.b16 %v909
    %v1282 = vunpack.c.h.b16 %v909
    %v1283 = vunpack.c.l.b16 %v910
    %v1284 = vunpack.c.h.b16 %v910
    %v1285 = vunpack.c.l.b16 %v911
    %v1286 = vunpack.c.h.b16 %v911
    %v1287 = vunpack.c.l.b16 %v912
    %v1288 = vunpack.c.h.b16 %v912
    %v1289 = vunpack.c.l.b16 %v913
    %v1290 = vunpack.c.h.b16 %v913
    %v1291 = vunpack.c.l.b16 %v914
    %v1292 = vunpack.c.h.b16 %v914
    %v1293 = vunpack.c.l.b16 %v915
    %v1294 = vunpack.c.h.b16 %v915
    %v1295 = vunpack.c.l.b16 %v916
    %v1296 = vunpack.c.h.b16 %v916
    %v1297 = vunpack.c.l.b16 %v917
    %v1298 = vunpack.c.h.b16 %v917
    %v1299 = vunpack.c.l.b16 %v918
    %v1300 = vunpack.c.h.b16 %v918
    %v1301 = vunpack.c.l.b16 %v919
    %v1302 = vunpack.c.h.b16 %v919
    %v1303 = vunpack.c.l.b16 %v920
    %v1304 = vunpack.c.h.b16 %v920
    %v1305 = vunpack.c.l.b16 %v921
    %v1306 = vunpack.c.h.b16 %v921
    %v1307 = vunpack.c.l.b16 %v922
    %v1308 = vunpack.c.h.b16 %v922
    %v1309 = vunpack.c.l.b16 %v923
    %v1310 = vunpack.c.h.b16 %v923
    %v1311 = vunpack.c.l.b16 %v924
    %v1312 = vunpack.c.h.b16 %v924
    %v1313 = vunpack.c.l.b16 %v925
    %v1314 = vunpack.c.h.b16 %v925
    %v1315 = vunpack.c.l.b16 %v926
    %v1316 = vunpack.c.h.b16 %v926
    %v1317 = vunpack.c.l.b16 %v927
    %v1318 = vunpack.c.h.b16 %v927
    %v1319 = vunpack.c.l.b16 %v928
    %v1320 = vunpack.c.h.b16 %v928
    %v1321 = vunpack.c.l.b16 %v929
    %v1322 = vunpack.c.h.b16 %v929
    %v1323 = vunpack.c.l.b16 %v930
    %v1324 = vunpack.c.h.b16 %v930
    %v1325 = vunpack.c.l.b16 %v931
    %v1326 = vunpack.c.h.b16 %v931
    %v1327 = vunpack.c.l.b16 %v932
    %v1328 = vunpack.c.h.b16 %v932
    %v1329 = vunpack.c.l.b16 %v933
    %v1330 = vunpack.c.h.b16 %v933
    %v1331 = vunpack.c.l.b16 %v934
    %v1332 = vunpack.c.h.b16 %v934
    %v1333 = vunpack.c.l.b16 %v935
    %v1334 = vunpack.c.h.b16 %v935
    %v1335 = vunpack.c.l.b16 %v936
    %v1336 = vunpack.c.h.b16 %v936
    %v1337 = vunpack.c.l.b16 %v937
    %v1338 = vunpack.c.h.b16 %v937
    %v1339 = vunpack.c.l.b16 %v938
    %v1340 = vunpack.c.h.b16 %v938
    %v1341 = vunpack.c.l.b16 %v939
    %v1342 = vunpack.c.h.b16 %v939
    %v1343 = vunpack.c.l.b16 %v940
    %v1344 = vunpack.c.h.b16 %v940
    %v1345 = vunpack.c.l.b16 %v941
    %v1346 = vunpack.c.h.b16 %v941
    %v1347 = vunpack.c.l.b16 %v942
    %v1348 = vunpack.c.h.b16 %v942
    %v1349 = vunpack.c.l.b16 %v943
    %v1350 = vunpack.c.h.b16 %v943
    %v1351 = vunpack.c.l.b16 %v944
    %v1352 = vunpack.c.h.b16 %v944
    %v1353 = vunpack.c.l.b16 %v945
    %v1354 = vunpack.c.h.b16 %v945
    %v1355 = vunpack.c.l.b16 %v946
    %v1356 = vunpack.c.h.b16 %v946
    %v1357 = vunpack.c.l.b16 %v947
    %v1358 = vunpack.c.h.b16 %v947
    %v1359 = vunpack.c.l.b16 %v948
    %v1360 = vunpack.c.h.b16 %v948
    %v1361 = vunpack.c.l.b16 %v949
    %v1362 = vunpack.c.h.b16 %v949
    %v1363 = vunpack.c.l.b16 %v950
    %v1364 = vunpack.c.h.b16 %v950
    %v1365 = vunpack.c.l.b16 %v951
    %v1366 = vunpack.c.h.b16 %v951
    %v1367 = vunpack.c.l.b16 %v952
    %v1368 = vunpack.c.h.b16 %v952
    %v1369 = vunpack.c.l.b16 %v953
    %v1370 = vunpack.c.h.b16 %v953
    %v1371 = vunpack.c.l.b16 %v954
    %v1372 = vunpack.c.h.b16 %v954
    %v1373 = vunpack.c.l.b16 %v955
    %v1374 = vunpack.c.h.b16 %v955
    %v1375 = vpack.c.b16 %v1123, %v1119
    %v1376 = vpack.c.b16 %v1124, %v1120
    %v1377 = vpack.c.b16 %v1125, %v1121
    %v1378 = vpack.c.b16 %v1126, %v1122
    %v1379 = vpack.c.b16 %v1131, %v1127
    %v1380 = vpack.c.b16 %v1132, %v1128
    %v1381 = vpack.c.b16 %v1133, %v1129
    %v1382 = vpack.c.b16 %v1134, %v1130
    %v1383 = vpack.c.b16 %v1139, %v1135
    %v1384 = vpack.c.b16 %v1140, %v1136
    %v1385 = vpack.c.b16 %v1141, %v1137
    %v1386 = vpack.c.b16 %v1142, %v1138
    %v1387 = vpack.c.b16 %v1147, %v1143
    %v1388 = vpack.c.b16 %v1148, %v1144
    %v1389 = vpack.c.b16 %v1149, %v1145
    %v1390 = vpack.c.b16 %v1150, %v1146
    %v1391 = vpack.c.b16 %v1155, %v1151
    %v1392 = vpack.c.b16 %v1156, %v1152
    %v1393 = vpack.c.b16 %v1157, %v1153
    %v1394 = vpack.c.b16 %v1158, %v1154
    %v1395 = vpack.c.b16 %v1163, %v1159
    %v1396 = vpack.c.b16 %v1164, %v1160
    %v1397 = vpack.c.b16 %v1165, %v1161
    %v1398 = vpack.c.b16 %v1166, %v1162
    %v1399 = vpack.c.b16 %v1171, %v1167
    %v1400 = vpack.c.b16 %v1172, %v1168
    %v1401 = vpack.c.b16 %v1173, %v1169
    %v1402 = vpack.c.b16 %v1174, %v1170
    %v1403 = vpack.c.b16 %v1179, %v1175
    %v1404 = vpack.c.b16 %v1180, %v1176
    %v1405 = vpack.c.b16 %v1181, %v1177
    %v1406 = vpack.c.b16 %v1182, %v1178
    %v1407 = vpack.c.b16 %v1187, %v1183
    %v1408 = vpack.c.b16 %v1188, %v1184
    %v1409 = vpack.c.b16 %v1189, %v1185
    %v1410 = vpack.c.b16 %v1190, %v1186
    %v1411 = vpack.c.b16 %v1195, %v1191
    %v1412 = vpack.c.b16 %v1196, %v1192
    %v1413 = vpack.c.b16 %v1197, %v1193
    %v1414 = vpack.c.b16 %v1198, %v1194
    %v1415 = vpack.c.b16 %v1203, %v1199
    %v1416 = vpack.c.b16 %v1204, %v1200
    %v1417 = vpack.c.b16 %v1205, %v1201
    %v1418 = vpack.c.b16 %v1206, %v1202
    %v1419 = vpack.c.b16 %v1211, %v1207
    %v1420 = vpack.c.b16 %v1212, %v1208
    %v1421 = vpack.c.b16 %v1213, %v1209
    %v1422 = vpack.c.b16 %v1214, %v1210
    %v1423 = vpack.c.b16 %v1219, %v1215
    %v1424 = vpack.c.b16 %v1220, %v1216
    %v1425 = vpack.c.b16 %v1221, %v1217
    %v1426 = vpack.c.b16 %v1222, %v1218
    %v1427 = vpack.c.b16 %v1227, %v1223
    %v1428 = vpack.c.b16 %v1228, %v1224
    %v1429 = vpack.c.b16 %v1229, %v1225
    %v1430 = vpack.c.b16 %v1230, %v1226
    %v1431 = vpack.c.b16 %v1235, %v1231
    %v1432 = vpack.c.b16 %v1236, %v1232
    %v1433 = vpack.c.b16 %v1237, %v1233
    %v1434 = vpack.c.b16 %v1238, %v1234
    %v1435 = vpack.c.b16 %v1243, %v1239
    %v1436 = vpack.c.b16 %v1244, %v1240
    %v1437 = vpack.c.b16 %v1245, %v1241
    %v1438 = vpack.c.b16 %v1246, %v1242
    %v1439 = vpack.c.b16 %v1251, %v1247
    %v1440 = vpack.c.b16 %v1252, %v1248
    %v1441 = vpack.c.b16 %v1253, %v1249
    %v1442 = vpack.c.b16 %v1254, %v1250
    %v1443 = vpack.c.b16 %v1259, %v1255
    %v1444 = vpack.c.b16 %v1260, %v1256
    %v1445 = vpack.c.b16 %v1261, %v1257
    %v1446 = vpack.c.b16 %v1262, %v1258
    %v1447 = vpack.c.b16 %v1267, %v1263
    %v1448 = vpack.c.b16 %v1268, %v1264
    %v1449 = vpack.c.b16 %v1269, %v1265
    %v1450 = vpack.c.b16 %v1270, %v1266
    %v1451 = vpack.c.b16 %v1275, %v1271
    %v1452 = vpack.c.b16 %v1276, %v1272
    %v1453 = vpack.c.b16 %v1277, %v1273
    %v1454 = vpack.c.b16 %v1278, %v1274
    %v1455 = vpack.c.b16 %v1283, %v1279
    %v1456 = vpack.c.b16 %v1284, %v1280
    %v1457 = vpack.c.b16 %v1285, %v1281
    %v1458 = vpack.c.b16 %v1286, %v1282
    %v1459 = vpack.c.b16 %v1291, %v1287
    %v1460 = vpack.c.b16 %v1292, %v1288
    %v1461 = vpack.c.b16 %v1293, %v1289
    %v1462 = vpack.c.b16 %v1294, %v1290
    %v1463 = vpack.c.b16 %v1299, %v1295
    %v1464 = vpack.c.b16 %v1300, %v1296
    %v1465 = vpack.c.b16 %v1301, %v1297
    %v1466 = vpack.c.b16 %v1302, %v1298
    %v1467 = vpack.c.b16 %v1307, %v1303
    %v1468 = vpack.c.b16 %v1308, %v1304
    %v1469 = vpack.c.b16 %v1309, %v1305
    %v1470 = vpack.c.b16 %v1310, %v1306
    %v1471 = vpack.c.b16 %v1315, %v1311
    %v1472 = vpack.c.b16 %v1316, %v1312
    %v1473 = vpack.c.b16 %v1317, %v1313
    %v1474 = vpack.c.b16 %v1318, %v1314
    %v1475 = vpack.c.b16 %v1323, %v1319
    %v1476 = vpack.c.b16 %v1324, %v1320
    %v1477 = vpack.c.b16 %v1325, %v1321
    %v1478 = vpack.c.b16 %v1326, %v1322
    %v1479 = vpack.c.b16 %v1331, %v1327
    %v1480 = vpack.c.b16 %v1332, %v1328
    %v1481 = vpack.c.b16 %v1333, %v1329
    %v1482 = vpack.c.b16 %v1334, %v1330
    %v1483 = vpack.c.b16 %v1339, %v1335
    %v1484 = vpack.c.b16 %v1340, %v1336
    %v1485 = vpack.c.b16 %v1341, %v1337
    %v1486 = vpack.c.b16 %v1342, %v1338
    %v1487 = vpack.c.b16 %v1347, %v1343
    %v1488 = vpack.c.b16 %v1348, %v1344
    %v1489 = vpack.c.b16 %v1349, %v1345
    %v1490 = vpack.c.b16 %v1350, %v1346
    %v1491 = vpack.c.b16 %v1355, %v1351
    %v1492 = vpack.c.b16 %v1356, %v1352
    %v1493 = vpack.c.b16 %v1357, %v1353
    %v1494 = vpack.c.b16 %v1358, %v1354
    %v1495 = vpack.c.b16 %v1363, %v1359
    %v1496 = vpack.c.b16 %v1364, %v1360
    %v1497 = vpack.c.b16 %v1365, %v1361
    %v1498 = vpack.c.b16 %v1366, %v1362
    %v1499 = vpack.c.b16 %v1371, %v1367
    %v1500 = vpack.c.b16 %v1372, %v1368
    %v1501 = vpack.c.b16 %v1373, %v1369
    %v1502 = vpack.c.b16 %v1374, %v1370
    %1631 = vmatprep.subr.bf16.mxu0 %v1376
    %1632 = vmatpush1.bf16.msra.mxu0 %v1375
    %1633 = vmatprep.subr.bf16.mxu0 %v1380
    %1634 = vmatpush1.bf16.msra.mxu0 %v1379
    %1635 = vmatprep.subr.bf16.mxu0 %v1384
    %1636 = vmatpush1.bf16.msra.mxu0 %v1383
    %1637 = vmatprep.subr.bf16.mxu0 %v1388
    %1638 = vmatpush1.bf16.msra.mxu0 %v1387
    %1639 = vmatprep.subr.bf16.mxu0 %v1392
    %1640 = vmatpush1.bf16.msra.mxu0 %v1391
    %1641 = vmatprep.subr.bf16.mxu0 %v1396
    %1642 = vmatpush1.bf16.msra.mxu0 %v1395
    %1643 = vmatprep.subr.bf16.mxu0 %v1400
    %1644 = vmatpush1.bf16.msra.mxu0 %v1399
    %1645 = vmatprep.subr.bf16.mxu0 %v1404
    %1646 = vmatpush1.bf16.msra.mxu0 %v1403
    %1647 = vmatprep.subr.bf16.mxu0 %v1408
    %1648 = vmatpush1.bf16.msra.mxu0 %v1407
    %1649 = vmatprep.subr.bf16.mxu0 %v1412
    %1650 = vmatpush1.bf16.msra.mxu0 %v1411
    %1651 = vmatprep.subr.bf16.mxu0 %v1416
    %1652 = vmatpush1.bf16.msra.mxu0 %v1415
    %1653 = vmatprep.subr.bf16.mxu0 %v1420
    %1654 = vmatpush1.bf16.msra.mxu0 %v1419
    %1655 = vmatprep.subr.bf16.mxu0 %v1424
    %1656 = vmatpush1.bf16.msra.mxu0 %v1423
    %1657 = vmatprep.subr.bf16.mxu0 %v1428
    %1658 = vmatpush1.bf16.msra.mxu0 %v1427
    %1659 = vmatprep.subr.bf16.mxu0 %v1432
    %1660 = vmatpush1.bf16.msra.mxu0 %v1431
    %1661 = vmatprep.subr.bf16.mxu0 %v1436
    %1662 = vmatpush1.bf16.msra.mxu0 %v1435
    %1663 = vmatprep.mubr.bf16.mxu0 %v984
    %1664 = vmatmul.mubr.bf16.gmra.mrb[0].mxu0 %v983
    %v1665 = vpop.f32.mrb[0].mxu0
    %v1666 = vadd.f32 %v960, %v1665
    %v1667 = vpop.f32.mrb[0].mxu0
    %v1668 = vadd.f32 %v964, %v1667
    %v1669 = vpop.f32.mrb[0].mxu0
    %v1670 = vpop.f32.mrb[0].mxu0
    %1671 = vdwg.mxu0
    %1672 = vmatprep.subr.bf16.mxu0 %v1440
    %1673 = vmatpush1.bf16.msra.mxu0 %v1439
    %1674 = vmatprep.subr.bf16.mxu0 %v1444
    %1675 = vmatpush1.bf16.msra.mxu0 %v1443
    %1676 = vmatprep.subr.bf16.mxu0 %v1448
    %1677 = vmatpush1.bf16.msra.mxu0 %v1447
    %1678 = vmatprep.subr.bf16.mxu0 %v1452
    %1679 = vmatpush1.bf16.msra.mxu0 %v1451
    %1680 = vmatprep.subr.bf16.mxu0 %v1456
    %1681 = vmatpush1.bf16.msra.mxu0 %v1455
    %1682 = vmatprep.subr.bf16.mxu0 %v1460
    %1683 = vmatpush1.bf16.msra.mxu0 %v1459
    %1684 = vmatprep.subr.bf16.mxu0 %v1464
    %1685 = vmatpush1.bf16.msra.mxu0 %v1463
    %1686 = vmatprep.subr.bf16.mxu0 %v1468
    %1687 = vmatpush1.bf16.msra.mxu0 %v1467
    %1688 = vmatprep.subr.bf16.mxu0 %v1472
    %1689 = vmatpush1.bf16.msra.mxu0 %v1471
    %1690 = vmatprep.subr.bf16.mxu0 %v1476
    %1691 = vmatpush1.bf16.msra.mxu0 %v1475
    %1692 = vmatprep.subr.bf16.mxu0 %v1480
    %1693 = vmatpush1.bf16.msra.mxu0 %v1479
    %1694 = vmatprep.subr.bf16.mxu0 %v1484
    %1695 = vmatpush1.bf16.msra.mxu0 %v1483
    %1696 = vmatprep.subr.bf16.mxu0 %v1488
    %1697 = vmatpush1.bf16.msra.mxu0 %v1487
    %1698 = vmatprep.subr.bf16.mxu0 %v1492
    %1699 = vmatpush1.bf16.msra.mxu0 %v1491
    %1700 = vmatprep.subr.bf16.mxu0 %v1496
    %1701 = vmatpush1.bf16.msra.mxu0 %v1495
    %1702 = vmatprep.subr.bf16.mxu0 %v1500
    %1703 = vmatpush1.bf16.msra.mxu0 %v1499
    %1704 = vmatprep.mubr.bf16.mxu0 %v986
    %1705 = vmatmul.mubr.bf16.gmra.mrb[0].mxu0 %v985
    %v1706 = vpop.f32.mrb[0].mxu0
    %v1707 = vadd.f32 %v1666, %v1706
    %v1708 = vpop.f32.mrb[0].mxu0
    %v1709 = vadd.f32 %v1668, %v1708
    %v1710 = vpop.f32.mrb[0].mxu0
    %v1711 = vpop.f32.mrb[0].mxu0
    %1712 = vdwg.mxu0
    %1713 = vmatprep.subr.bf16.mxu0 %v1378
    %1714 = vmatpush1.bf16.msra.mxu0 %v1377
    %1715 = vmatprep.subr.bf16.mxu0 %v1382
    %1716 = vmatpush1.bf16.msra.mxu0 %v1381
    %1717 = vmatprep.subr.bf16.mxu0 %v1386
    %1718 = vmatpush1.bf16.msra.mxu0 %v1385
    %1719 = vmatprep.subr.bf16.mxu0 %v1390
    %1720 = vmatpush1.bf16.msra.mxu0 %v1389
    %1721 = vmatprep.subr.bf16.mxu0 %v1394
    %1722 = vmatpush1.bf16.msra.mxu0 %v1393
    %1723 = vmatprep.subr.bf16.mxu0 %v1398
    %1724 = vmatpush1.bf16.msra.mxu0 %v1397
    %1725 = vmatprep.subr.bf16.mxu0 %v1402
    %1726 = vmatpush1.bf16.msra.mxu0 %v1401
    %1727 = vmatprep.subr.bf16.mxu0 %v1406
    %1728 = vmatpush1.bf16.msra.mxu0 %v1405
    %1729 = vmatprep.subr.bf16.mxu0 %v1410
    %1730 = vmatpush1.bf16.msra.mxu0 %v1409
    %1731 = vmatprep.subr.bf16.mxu0 %v1414
    %1732 = vmatpush1.bf16.msra.mxu0 %v1413
    %1733 = vmatprep.subr.bf16.mxu0 %v1418
    %1734 = vmatpush1.bf16.msra.mxu0 %v1417
    %1735 = vmatprep.subr.bf16.mxu0 %v1422
    %1736 = vmatpush1.bf16.msra.mxu0 %v1421
    %1737 = vmatprep.subr.bf16.mxu0 %v1426
    %1738 = vmatpush1.bf16.msra.mxu0 %v1425
    %1739 = vmatprep.subr.bf16.mxu0 %v1430
    %1740 = vmatpush1.bf16.msra.mxu0 %v1429
    %1741 = vmatprep.subr.bf16.mxu0 %v1434
    %1742 = vmatpush1.bf16.msra.mxu0 %v1433
    %1743 = vmatprep.subr.bf16.mxu0 %v1438
    %1744 = vmatpush1.bf16.msra.mxu0 %v1437
    %1745 = vmatprep.mubr.bf16.mxu0 %v984
    %1746 = vmatmul.mubr.bf16.gmra.mrb[0].mxu0 %v983
    %v1747 = vpop.f32.mrb[0].mxu0
    %v1748 = vadd.f32 %v968, %v1747
    %v1749 = vpop.f32.mrb[0].mxu0
    %v1750 = vadd.f32 %v972, %v1749
    %v1751 = vpop.f32.mrb[0].mxu0
    %v1752 = vpop.f32.mrb[0].mxu0
    %1753 = vdwg.mxu0
    %1754 = vmatprep.subr.bf16.mxu0 %v1442
    %1755 = vmatpush1.bf16.msra.mxu0 %v1441
    %1756 = vmatprep.subr.bf16.mxu0 %v1446
    %1757 = vmatpush1.bf16.msra.mxu0 %v1445
    %1758 = vmatprep.subr.bf16.mxu0 %v1450
    %1759 = vmatpush1.bf16.msra.mxu0 %v1449
    %1760 = vmatprep.subr.bf16.mxu0 %v1454
    %1761 = vmatpush1.bf16.msra.mxu0 %v1453
    %1762 = vmatprep.subr.bf16.mxu0 %v1458
    %1763 = vmatpush1.bf16.msra.mxu0 %v1457
    %1764 = vmatprep.subr.bf16.mxu0 %v1462
    %1765 = vmatpush1.bf16.msra.mxu0 %v1461
    %1766 = vmatprep.subr.bf16.mxu0 %v1466
    %1767 = vmatpush1.bf16.msra.mxu0 %v1465
    %1768 = vmatprep.subr.bf16.mxu0 %v1470
    %1769 = vmatpush1.bf16.msra.mxu0 %v1469
    %1770 = vmatprep.subr.bf16.mxu0 %v1474
    %1771 = vmatpush1.bf16.msra.mxu0 %v1473
    %1772 = vmatprep.subr.bf16.mxu0 %v1478
    %1773 = vmatpush1.bf16.msra.mxu0 %v1477
    %1774 = vmatprep.subr.bf16.mxu0 %v1482
    %1775 = vmatpush1.bf16.msra.mxu0 %v1481
    %1776 = vmatprep.subr.bf16.mxu0 %v1486
    %1777 = vmatpush1.bf16.msra.mxu0 %v1485
    %1778 = vmatprep.subr.bf16.mxu0 %v1490
    %1779 = vmatpush1.bf16.msra.mxu0 %v1489
    %1780 = vmatprep.subr.bf16.mxu0 %v1494
    %1781 = vmatpush1.bf16.msra.mxu0 %v1493
    %1782 = vmatprep.subr.bf16.mxu0 %v1498
    %1783 = vmatpush1.bf16.msra.mxu0 %v1497
    %1784 = vmatprep.subr.bf16.mxu0 %v1502
    %1785 = vmatpush1.bf16.msra.mxu0 %v1501
    %1786 = vmatprep.mubr.bf16.mxu0 %v986
    %1787 = vmatmul.mubr.bf16.gmra.mrb[0].mxu0 %v985
    %v1788 = vpop.f32.mrb[0].mxu0
    %v1789 = vadd.f32 %v1748, %v1788
    %v1790 = vpop.f32.mrb[0].mxu0
    %v1791 = vadd.f32 %v1750, %v1790
    %v1792 = vpop.f32.mrb[0].mxu0
    %v1793 = vpop.f32.mrb[0].mxu0
    %1794 = vdwg.mxu0
    %1796 = vrot.lane.b32.xlu0 %v822, 64
    %v1797 = vpop.permute.xlu0 %1796
    %1799 = vrot.lane.b32.xlu0 %v824, 64
    %v1800 = vpop.permute.xlu0 %1799
    %1802 = vrot.lane.b32.xlu0 %v1707, 64
    %v1803 = vpop.permute.xlu0 %1802
    %1805 = vrot.lane.b32.xlu0 %v1709, 64
    %v1806 = vpop.permute.xlu0 %1805
    %1808 = vrot.lane.b32.xlu0 %v1789, 64
    %v1809 = vpop.permute.xlu0 %1808
    %1812 = vrot.lane.b32.xlu0 %v1791, 64
    %v1813 = vpop.permute.xlu0 %1812
    %vm1815 = vcmask 523264
    %v1816 = vsel %vm1815, %v822, 0
    %v1818 = vsel %vm1815, %v1797, 0
    %v1820 = vsel %vm1815, %v824, 0
    %v1822 = vsel %vm1815, %v1800, 0
    %v1824 = vsel %vm1815, %v1707, 0
    %v1826 = vsel %vm1815, %v1803, 0
    %v1828 = vsel %vm1815, %v1709, 0
    %v1830 = vsel %vm1815, %v1806, 0
    %1832 = vmatprep.subr.mxu0 0.0
    %1833 = vmatpush1.xpose.msra.mxu0 %v1824
    %1834 = vmatprep.subr.mxu0 0.0
    %1835 = vmatpush1.xpose.msra.mxu0 %v1826
    %1836 = vmatprep.subr.mxu0 0.0
    %1837 = vmatpush1.xpose.msra.mxu0 %v1828
    %1838 = vmatprep.subr.mxu0 0.0
    %1839 = vmatpush1.xpose.msra.mxu0 %v1830
    %1840 = vmatprep.subr.mxu0 0.0
    %1841 = vmatpush1.xpose.msra.mxu0 0.0
    %1842 = vmatprep.subr.mxu0 0.0
    %1843 = vmatpush1.xpose.msra.mxu0 0.0
    %1844 = vmatprep.subr.mxu0 0.0
    %1845 = vmatpush1.xpose.msra.mxu0 0.0
    %1846 = vmatprep.subr.mxu0 0.0
    %1847 = vmatpush1.xpose.msra.mxu0 0.0
    %1848 = vmatprep.subr.mxu0 0.0
    %1849 = vmatpush1.xpose.msra.mxu0 0.0
    %1850 = vmatprep.subr.mxu0 0.0
    %1851 = vmatpush1.xpose.msra.mxu0 0.0
    %1852 = vmatprep.subr.mxu0 0.0
    %1853 = vmatpush1.xpose.msra.mxu0 0.0
    %1854 = vmatprep.subr.mxu0 0.0
    %1855 = vmatpush1.xpose.msra.mxu0 0.0
    %1856 = vmatprep.subr.mxu0 0.0
    %1857 = vmatpush1.xpose.msra.mxu0 0.0
    %1858 = vmatprep.subr.mxu0 0.0
    %1859 = vmatpush1.xpose.msra.mxu0 0.0
    %1860 = vmatprep.subr.mxu0 0.0
    %1861 = vmatpush1.xpose.msra.mxu0 0.0
    %1862 = vmatprep.subr.mxu0 0.0
    %1863 = vmatpush1.xpose.msra.mxu0 0.0
    %1864 = vmatprep.subr.mxu0 0.0
    %1865 = vmatpush1.xpose.msra.mxu0 0.0
    %1866 = vmatprep.subr.mxu0 0.0
    %1867 = vmatpush1.xpose.msra.mxu0 0.0
    %1868 = vmatprep.subr.mxu0 0.0
    %1869 = vmatpush1.xpose.msra.mxu0 0.0
    %1870 = vmatprep.subr.mxu0 0.0
    %1871 = vmatpush1.xpose.msra.mxu0 0.0
    %1872 = vmatprep.subr.mxu0 0.0
    %1873 = vmatpush1.xpose.msra.mxu0 0.0
    %1874 = vmatprep.subr.mxu0 0.0
    %1875 = vmatpush1.xpose.msra.mxu0 0.0
    %1876 = vmatprep.subr.mxu0 0.0
    %1877 = vmatpush1.xpose.msra.mxu0 0.0
    %1878 = vmatprep.subr.mxu0 0.0
    %1879 = vmatpush1.xpose.msra.mxu0 0.0
    %1880 = vmatprep.subr.mxu0 0.0
    %1881 = vmatpush1.xpose.msra.mxu0 0.0
    %1882 = vmatprep.subr.mxu0 0.0
    %1883 = vmatpush1.xpose.msra.mxu0 0.0
    %1884 = vmatprep.subr.mxu0 0.0
    %1885 = vmatpush1.xpose.msra.mxu0 0.0
    %1886 = vmatprep.subr.mxu0 0.0
    %1887 = vmatpush1.xpose.msra.mxu0 0.0
    %1888 = vmatprep.subr.mxu0 0.0
    %1889 = vmatpush1.xpose.msra.mxu0 0.0
    %1890 = vmatprep.subr.mxu0 0.0
    %1891 = vmatpush1.xpose.msra.mxu0 0.0
    %1892 = vmatprep.subr.mxu0 0.0
    %1893 = vmatpush1.xpose.msra.mxu0 0.0
    %1894 = vmatprep.subr.mxu0 0.0
    %1895 = vmatpush1.xpose.msra.mxu0 0.0
    %1896 = vmatprep.mubr.f32.mxu0 0.0
    %1897 = vmatmul.mubr.f32.gmra.mrb[0].mxu0 %v1816
    %v1898 = vpop.f32.mrb[0].mxu0
    %v1899 = vadd.f32 0.0, %v1898
    %v1900 = vpop.f32.mrb[0].mxu0
    %1901 = vmatprep.mubr.f32.mxu0 0.0
    %1902 = vmatmul.mubr.f32.gmra.mrb[0].mxu0 %v1818
    %v1903 = vpop.f32.mrb[0].mxu0
    %v1904 = vadd.f32 0.0, %v1903
    %v1905 = vpop.f32.mrb[0].mxu0
    %1906 = vmatprep.mubr.f32.mxu0 0.0
    %1907 = vmatmul.mubr.f32.gmra.mrb[0].mxu0 %v1820
    %v1908 = vpop.f32.mrb[0].mxu0
    %v1909 = vadd.f32 0.0, %v1908
    %v1910 = vpop.f32.mrb[0].mxu0
    %1911 = vmatprep.mubr.f32.mxu0 0.0
    %1912 = vmatmul.mubr.f32.gmra.mrb[0].mxu0 %v1822
    %v1913 = vpop.f32.mrb[0].mxu0
    %v1914 = vadd.f32 0.0, %v1913
    %v1915 = vpop.f32.mrb[0].mxu0
    %1916 = vdwg.mxu0
    %v1917 = vlaneseq
    %v1918 = vshrl.u32 %v1917, 7
    %v1919 = vadd.s32 %v1918, 8
    %v1920 = vadd.s32 %v1918, 16
    %v1921 = vadd.s32 %v1918, 24
    %v1922 = vlaneseq
    %v1923 = vand.u32 %v1922, 127
    %v1924 = vshra.s32 %v1918, 3
    %v1925 = vshra.s32 %v1919, 3
    %v1926 = vshra.s32 %v1920, 3
    %v1927 = vshra.s32 %v1921, 3
    %v1928 = vshra.s32 %v1923, 3
    %vm1929 = vcmp.eq.s32.totalorder %v1924, %v1928
    %vm1930 = vcmp.eq.s32.totalorder %v1925, %v1928
    %vm1931 = vcmp.eq.s32.totalorder %v1926, %v1928
    %vm1932 = vcmp.eq.s32.totalorder %v1927, %v1928
    %v1933 = vsel %vm1929, %v1899, -1e+09
    %v1934 = vsel %vm1930, %v1904, -1e+09
    %v1935 = vsel %vm1931, %v1909, -1e+09
    %v1936 = vsel %vm1932, %v1914, -1e+09
    %vm1937 = vcmask 261120
    %v1938 = vsel %vm1937, %v1933, -inf
    %1939 = vmax.xlane.f32.xlu0 %v1938
    %v1940 = vpop.xlane.xlu0 %1939
    %v1941 = vsel %vm1937, %v1934, -inf
    %1942 = vmax.xlane.f32.xlu0 %v1941
    %v1943 = vpop.xlane.xlu0 %1942
    %v1944 = vsel %vm1937, %v1935, -inf
    %1945 = vmax.xlane.f32.xlu0 %v1944
    %v1946 = vpop.xlane.xlu0 %1945
    %v1947 = vsel %vm1937, %v1936, -inf
    %1948 = vmax.xlane.f32.xlu0 %v1947
    %v1949 = vpop.xlane.xlu0 %1948
    %v1950 = vsub.f32 %v1933, %v1940
    %v1951 = vsub.f32 %v1934, %v1943
    %v1952 = vsub.f32 %v1935, %v1946
    %v1953 = vsub.f32 %v1936, %v1949
    %v1954 = vmul.f32 %v1950, 1.442695
    %v1955 = vpow.pop %v1954
    %v1956 = vmul.f32 %v1951, 1.442695
    %v1957 = vpow.pop %v1956
    %v1958 = vmul.f32 %v1952, 1.442695
    %v1959 = vpow.pop %v1958
    %v1960 = vmul.f32 %v1953, 1.442695
    %v1961 = vpow.pop %v1960
    %v1962 = vsel %vm1937, %v1955, 0.0
    %1963 = vadd.xlane.f32.xlu0 %v1962
    %v1964 = vpop.xlane.xlu0 %1963
    %v1965 = vsel %vm1937, %v1957, 0.0
    %1966 = vadd.xlane.f32.xlu0 %v1965
    %v1967 = vpop.xlane.xlu0 %1966
    %v1968 = vsel %vm1937, %v1959, 0.0
    %1969 = vadd.xlane.f32.xlu0 %v1968
    %v1970 = vpop.xlane.xlu0 %1969
    %v1971 = vsel %vm1937, %v1961, 0.0
    %1972 = vadd.xlane.f32.xlu0 %v1971
    %v1973 = vpop.xlane.xlu0 %1972
    %v1974 = vrcp.pop %v1964
    %v1975 = vrcp.pop %v1967
    %v1976 = vrcp.pop %v1970
    %v1977 = vrcp.pop %v1973
    %v1978 = vmul.f32 %v1955, %v1974
    %v1979 = vmul.f32 %v1957, %v1975
    %v1980 = vmul.f32 %v1959, %v1976
    %v1981 = vmul.f32 %v1961, %v1977
    %v1983 = vsel %vm1937, %v1978, 0
    %v1986 = vsel %vm1937, %v1979, 0
    %v1989 = vsel %vm1937, %v1980, 0
    %v1992 = vsel %vm1937, %v1981, 0
    %1994 = vmatprep.subr.mxu0 0.0
    %1995 = vmatpush1.msra.mxu0 %v1789
    %1996 = vmatprep.subr.mxu0 0.0
    %1997 = vmatpush1.msra.mxu0 %v1809
    %1998 = vmatprep.subr.mxu0 0.0
    %1999 = vmatpush1.msra.mxu0 %v1791
    %2000 = vmatprep.subr.mxu0 0.0
    %2001 = vmatpush1.msra.mxu0 %v1813
    %2002 = vmatprep.subr.mxu0 0.0
    %2003 = vmatpush1.msra.mxu0 0.0
    %2004 = vmatprep.subr.mxu0 0.0
    %2005 = vmatpush1.msra.mxu0 0.0
    %2006 = vmatprep.subr.mxu0 0.0
    %2007 = vmatpush1.msra.mxu0 0.0
    %2008 = vmatprep.subr.mxu0 0.0
    %2009 = vmatpush1.msra.mxu0 0.0
    %2010 = vmatprep.subr.mxu0 0.0
    %2011 = vmatpush1.msra.mxu0 0.0
    %2012 = vmatprep.subr.mxu0 0.0
    %2013 = vmatpush1.msra.mxu0 0.0
    %2014 = vmatprep.subr.mxu0 0.0
    %2015 = vmatpush1.msra.mxu0 0.0
    %2016 = vmatprep.subr.mxu0 0.0
    %2017 = vmatpush1.msra.mxu0 0.0
    %2018 = vmatprep.subr.mxu0 0.0
    %2019 = vmatpush1.msra.mxu0 0.0
    %2020 = vmatprep.subr.mxu0 0.0
    %2021 = vmatpush1.msra.mxu0 0.0
    %2022 = vmatprep.subr.mxu0 0.0
    %2023 = vmatpush1.msra.mxu0 0.0
    %2024 = vmatprep.subr.mxu0 0.0
    %2025 = vmatpush1.msra.mxu0 0.0
    %2026 = vmatprep.subr.mxu0 0.0
    %2027 = vmatpush1.msra.mxu0 0.0
    %2028 = vmatprep.subr.mxu0 0.0
    %2029 = vmatpush1.msra.mxu0 0.0
    %2030 = vmatprep.subr.mxu0 0.0
    %2031 = vmatpush1.msra.mxu0 0.0
    %2032 = vmatprep.subr.mxu0 0.0
    %2033 = vmatpush1.msra.mxu0 0.0
    %2034 = vmatprep.subr.mxu0 0.0
    %2035 = vmatpush1.msra.mxu0 0.0
    %2036 = vmatprep.subr.mxu0 0.0
    %2037 = vmatpush1.msra.mxu0 0.0
    %2038 = vmatprep.subr.mxu0 0.0
    %2039 = vmatpush1.msra.mxu0 0.0
    %2040 = vmatprep.subr.mxu0 0.0
    %2041 = vmatpush1.msra.mxu0 0.0
    %2042 = vmatprep.subr.mxu0 0.0
    %2043 = vmatpush1.msra.mxu0 0.0
    %2044 = vmatprep.subr.mxu0 0.0
    %2045 = vmatpush1.msra.mxu0 0.0
    %2046 = vmatprep.subr.mxu0 0.0
    %2047 = vmatpush1.msra.mxu0 0.0
    %2048 = vmatprep.subr.mxu0 0.0
    %2049 = vmatpush1.msra.mxu0 0.0
    %2050 = vmatprep.subr.mxu0 0.0
    %2051 = vmatpush1.msra.mxu0 0.0
    %2052 = vmatprep.subr.mxu0 0.0
    %2053 = vmatpush1.msra.mxu0 0.0
    %2054 = vmatprep.subr.mxu0 0.0
    %2055 = vmatpush1.msra.mxu0 0.0
    %2056 = vmatprep.subr.mxu0 0.0
    %2057 = vmatpush1.msra.mxu0 0.0
    %2058 = vmatprep.mubr.f32.mxu0 0.0
    %2059 = vmatmul.mubr.f32.gmra.mrb[0].mxu0 %v1983
    %v2060 = vpop.f32.mrb[0].mxu0
    %v2061 = vadd.f32 0.0, %v2060
    %v2062 = vpop.f32.mrb[0].mxu0
    %2063 = vmatprep.mubr.f32.mxu0 0.0
    %2064 = vmatmul.mubr.f32.gmra.mrb[0].mxu0 %v1986
    %v2065 = vpop.f32.mrb[0].mxu0
    %v2066 = vadd.f32 0.0, %v2065
    %v2067 = vpop.f32.mrb[0].mxu0
    %2068 = vmatprep.mubr.f32.mxu0 0.0
    %2069 = vmatmul.mubr.f32.gmra.mrb[0].mxu0 %v1989
    %v2070 = vpop.f32.mrb[0].mxu0
    %v2071 = vadd.f32 0.0, %v2070
    %v2072 = vpop.f32.mrb[0].mxu0
    %2073 = vmatprep.mubr.f32.mxu0 0.0
    %2074 = vmatmul.mubr.f32.gmra.mrb[0].mxu0 %v1992
    %v2075 = vpop.f32.mrb[0].mxu0
    %v2076 = vadd.f32 0.0, %v2075
    %v2077 = vpop.f32.mrb[0].mxu0
    %2078 = vdwg.mxu0
    %2080 = vrot.lane.b32.xlu0 %v2066, 64
    %v2081 = vpop.permute.xlu0 %2080
    %2084 = vrot.lane.b32.xlu0 %v2076, 64
    %v2085 = vpop.permute.xlu0 %2084
    %v2087 = vsel %vm1815, %v2061, %v2081
    %v2088 = vsel %vm1815, %v2071, %v2085
    %v2089 = vpack.c.bf16 %v2087, %v2087
    %v2090 = vpack.c.bf16 %v2088, %v2088
    %v2091 = vld [vmem:[#allocation10] sm:$0xf]
    %v2092 = vld [vmem:[#allocation10 + $0x4] sm:$0xf]
    %v2093 = vld [vmem:[#allocation10 + $0x8] sm:$0xf]
    %v2094 = vld [vmem:[#allocation10 + $0xc] sm:$0xf]
    %v2095 = vld [vmem:[#allocation10 + $0x10] sm:$0xf]
    %v2096 = vld [vmem:[#allocation10 + $0x14] sm:$0xf]
    %v2097 = vld [vmem:[#allocation10 + $0x18] sm:$0xf]
    %v2098 = vld [vmem:[#allocation10 + $0x1c] sm:$0xf]
    %v2099 = vld [vmem:[#allocation10 + $0x20] sm:$0xf]
    %v2100 = vld [vmem:[#allocation10 + $0x24] sm:$0xf]
    %v2101 = vld [vmem:[#allocation10 + $0x28] sm:$0xf]
    %v2102 = vld [vmem:[#allocation10 + $0x2c] sm:$0xf]
    %v2103 = vld [vmem:[#allocation10 + $0x30] sm:$0xf]
    %v2104 = vld [vmem:[#allocation10 + $0x34] sm:$0xf]
    %v2105 = vld [vmem:[#allocation10 + $0x38] sm:$0xf]
    %v2106 = vld [vmem:[#allocation10 + $0x3c] sm:$0xf]
    %v2107 = vld [vmem:[#allocation10 + $0x40] sm:$0xf]
    %v2108 = vld [vmem:[#allocation10 + $0x44] sm:$0xf]
    %v2109 = vld [vmem:[#allocation10 + $0x48] sm:$0xf]
    %v2110 = vld [vmem:[#allocation10 + $0x4c] sm:$0xf]
    %v2111 = vld [vmem:[#allocation10 + $0x50] sm:$0xf]
    %v2112 = vld [vmem:[#allocation10 + $0x54] sm:$0xf]
    %v2113 = vld [vmem:[#allocation10 + $0x58] sm:$0xf]
    %v2114 = vld [vmem:[#allocation10 + $0x5c] sm:$0xf]
    %v2115 = vld [vmem:[#allocation10 + $0x60] sm:$0xf]
    %v2116 = vld [vmem:[#allocation10 + $0x64] sm:$0xf]
    %v2117 = vld [vmem:[#allocation10 + $0x68] sm:$0xf]
    %v2118 = vld [vmem:[#allocation10 + $0x6c] sm:$0xf]
    %v2119 = vld [vmem:[#allocation10 + $0x70] sm:$0xf]
    %v2120 = vld [vmem:[#allocation10 + $0x74] sm:$0xf]
    %v2121 = vld [vmem:[#allocation10 + $0x78] sm:$0xf]
    %v2122 = vld [vmem:[#allocation10 + $0x7c] sm:$0xf]
    %v2124 = vlaneseq
    %v2125 = vshrl.u32 %v2124, 7
    %v2126 = vsub.s32 0, %v2125
    %v2127 = vrot.slane %v91, %v2126
    %v2161 = vunpack.c.l.b16 %v2091
    %v2162 = vunpack.c.l.b16 %v2092
    %v2163 = vunpack.c.l.b16 %v2093
    %v2164 = vunpack.c.l.b16 %v2094
    %v2165 = vunpack.c.l.b16 %v2095
    %v2166 = vunpack.c.l.b16 %v2096
    %v2167 = vunpack.c.l.b16 %v2097
    %v2168 = vunpack.c.l.b16 %v2098
    %v2169 = vunpack.c.l.b16 %v2099
    %v2170 = vunpack.c.l.b16 %v2100
    %v2171 = vunpack.c.l.b16 %v2101
    %v2172 = vunpack.c.l.b16 %v2102
    %v2173 = vunpack.c.l.b16 %v2103
    %v2174 = vunpack.c.l.b16 %v2104
    %v2175 = vunpack.c.l.b16 %v2105
    %v2176 = vunpack.c.l.b16 %v2106
    %v2177 = vunpack.c.l.b16 %v2107
    %v2178 = vunpack.c.l.b16 %v2108
    %v2179 = vunpack.c.l.b16 %v2109
    %v2180 = vunpack.c.l.b16 %v2110
    %v2181 = vunpack.c.l.b16 %v2111
    %v2182 = vunpack.c.l.b16 %v2112
    %v2183 = vunpack.c.l.b16 %v2113
    %v2184 = vunpack.c.l.b16 %v2114
    %v2185 = vunpack.c.l.b16 %v2115
    %v2186 = vunpack.c.l.b16 %v2116
    %v2187 = vunpack.c.l.b16 %v2117
    %v2188 = vunpack.c.l.b16 %v2118
    %v2189 = vunpack.c.l.b16 %v2119
    %v2190 = vunpack.c.l.b16 %v2120
    %v2191 = vunpack.c.l.b16 %v2121
    %v2192 = vunpack.c.l.b16 %v2122
    %v2193 = vpack.c.b16 %v2162, %v2161
    %v2194 = vpack.c.b16 %v2164, %v2163
    %v2195 = vpack.c.b16 %v2166, %v2165
    %v2196 = vpack.c.b16 %v2168, %v2167
    %v2197 = vpack.c.b16 %v2170, %v2169
    %v2198 = vpack.c.b16 %v2172, %v2171
    %v2199 = vpack.c.b16 %v2174, %v2173
    %v2200 = vpack.c.b16 %v2176, %v2175
    %v2201 = vpack.c.b16 %v2178, %v2177
    %v2202 = vpack.c.b16 %v2180, %v2179
    %v2203 = vpack.c.b16 %v2182, %v2181
    %v2204 = vpack.c.b16 %v2184, %v2183
    %v2205 = vpack.c.b16 %v2186, %v2185
    %v2206 = vpack.c.b16 %v2188, %v2187
    %v2207 = vpack.c.b16 %v2190, %v2189
    %v2208 = vpack.c.b16 %v2192, %v2191
    %2225 = vmatprep.subr.bf16.mxu0 0
    %2226 = vmatpush1.bf16.msra.mxu0 %v2193
    %2227 = vmatprep.subr.bf16.mxu0 0
    %2228 = vmatpush1.bf16.msra.mxu0 %v2194
    %2229 = vmatprep.subr.bf16.mxu0 0
    %2230 = vmatpush1.bf16.msra.mxu0 %v2195
    %2231 = vmatprep.subr.bf16.mxu0 0
    %2232 = vmatpush1.bf16.msra.mxu0 %v2196
    %2233 = vmatprep.subr.bf16.mxu0 0
    %2234 = vmatpush1.bf16.msra.mxu0 %v2197
    %2235 = vmatprep.subr.bf16.mxu0 0
    %2236 = vmatpush1.bf16.msra.mxu0 %v2198
    %2237 = vmatprep.subr.bf16.mxu0 0
    %2238 = vmatpush1.bf16.msra.mxu0 %v2199
    %2239 = vmatprep.subr.bf16.mxu0 0
    %2240 = vmatpush1.bf16.msra.mxu0 %v2200
    %2241 = vmatprep.subr.bf16.mxu0 0
    %2242 = vmatpush1.bf16.msra.mxu0 %v2201
    %2243 = vmatprep.subr.bf16.mxu0 0
    %2244 = vmatpush1.bf16.msra.mxu0 %v2202
    %2245 = vmatprep.subr.bf16.mxu0 0
    %2246 = vmatpush1.bf16.msra.mxu0 %v2203
    %2247 = vmatprep.subr.bf16.mxu0 0
    %2248 = vmatpush1.bf16.msra.mxu0 %v2204
    %2249 = vmatprep.subr.bf16.mxu0 0
    %2250 = vmatpush1.bf16.msra.mxu0 %v2205
    %2251 = vmatprep.subr.bf16.mxu0 0
    %2252 = vmatpush1.bf16.msra.mxu0 %v2206
    %2253 = vmatprep.subr.bf16.mxu0 0
    %2254 = vmatpush1.bf16.msra.mxu0 %v2207
    %2255 = vmatprep.subr.bf16.mxu0 0
    %2256 = vmatpush1.bf16.msra.mxu0 %v2208
    %2257 = vmatprep.mubr.bf16.mxu0 %v2090
    %2258 = vmatmul.mubr.bf16.gmra.mrb[0].mxu0 %v2089
    %v2259 = vpop.f32.mrb[0].mxu0
    %v2260 = vadd.f32 %v2127, %v2259
    %v2261 = vpop.f32.mrb[0].mxu0
    %v2262 = vpop.f32.mrb[0].mxu0
    %v2263 = vpop.f32.mrb[0].mxu0
    %2264 = vdwg.mxu0
    %2265 = vst [vmem:[#allocation11] sm:$0xff] %v2260
    // Predicated region
    $region46: #{tpu_custom_call.1} parent=1 // pred_check
      _
    $region47: #{tpu_custom_call.1} parent=1 // pred_check_branch
      %2267 = sbr.rel (0) target = $region49
    $region48: #{tpu_custom_call.1} parent=1 // pred_region
      %s2269 = ssub.s32 128, 128
      %2270 = vsyncadd [#allocation4], %s2269
      %s2272 = sshll.u32 [#allocation11], 4
      %s2273 = int_to_ptr.vmem [resolvable:$true] %s2272
      %2275 = dma.vmem_to_hbm [thread:$0]  %s2273, 128, %s6, [#allocation4]
    $region49: #{tpu_custom_call.1} parent=1 // pred_fallthru
      _
    // Predicated region
    $region50: #{tpu_custom_call.1} parent=1 // pred_check
      _
    $region51: #{tpu_custom_call.1} parent=1 // pred_check_branch
      %2277 = sbr.rel (0) target = $region53
    $region52: #{tpu_custom_call.1} parent=1 // pred_region
      %2278 = dma.done [#allocation4], 128
    $region53: #{tpu_custom_call.1} parent=1 // pred_fallthru
      _
    %2279 = vsyncpa [#allocation3], 1
    %2280 = vsyncpa [#allocation6], 1
    %2281 = vsyncpa [#allocation9], 1
    %2282 = vsyncpa [#allocation4], 1

</llo_original>
